<compile_context>
chip_gen: v7x
topology: tpu7x:2x2x1
jax: 0.10.0
libtpu: 0.0.40
codegen_flags: <defaults>
</compile_context>

<pallas_src>
import jax
import jax.numpy as jnp
from jax.experimental import pallas as pl
from jax.experimental.pallas import tpu as pltpu


def dark_residual_kernel(x_ref, w1_ref, b1_ref, w2_ref, b2_ref, out_ref,
                         pad_ref, xprev_ref):
    # x_ref/out_ref : (1, TH*W, C) row tile, already in 2-D matmul shape
    # w1_ref        : (C, Cmid) bf16, BN1 scale folded in
    # b1_ref        : (1, Cmid) f32 folded BN1 bias
    # w2_ref        : (3, 3*Cmid, C) bf16, grouped by kx, BN2 scale folded in
    # b2_ref        : (1, C) f32 folded BN2 bias
    # pad_ref       : (H+2, W+2, Cmid) bf16 padded conv1 output (per-core scratch)
    # xprev_ref     : (TH*W, C) f32 copy of the previous tile's x (residual add)
    r = pl.program_id(1)
    R = pl.num_programs(1) - 1               # number of row tiles per image
    Hp2, Wp2, Cmid = pad_ref.shape
    H, W = Hp2 - 2, Wp2 - 2
    THW, C = xprev_ref.shape
    TH = THW // W
    pdt = pad_ref.dtype

    # ---- once per image: zero only the 1-pixel border of the pad scratch.
    # conv1 writes never touch the border, so it stays zero for the image.
    @pl.when(r == 0)
    def _zero_border():
        pad_ref[pl.ds(0, 1), :, :] = jnp.zeros((1, Wp2, Cmid), pdt)
        pad_ref[pl.ds(Hp2 - 1, 1), :, :] = jnp.zeros((1, Wp2, Cmid), pdt)
        pad_ref[:, pl.ds(0, 1), :] = jnp.zeros((Hp2, 1, Cmid), pdt)
        pad_ref[:, pl.ds(Wp2 - 1, 1), :] = jnp.zeros((Hp2, 1, Cmid), pdt)

    # ---- (A) DarkConv #1 on row tile r: 1x1 conv == channel matmul (bf16 on
    # the MXU), folded-BN bias, LeakyReLU(0.1); result goes to the pad scratch.
    @pl.when(r < R)
    def _conv1():
        xm = x_ref[0].astype(jnp.bfloat16)                       # (TH*W, C)
        h = jnp.dot(xm, w1_ref[...], preferred_element_type=jnp.float32)
        h = h + b1_ref[...]
        h = jnp.where(h > 0, h, 0.1 * h)                         # (TH*W, Cmid)
        row0 = pl.multiple_of(r * TH, TH) + 1
        pad_ref[pl.ds(row0, TH), pl.ds(1, W), :] = (
            h.reshape(TH, W, Cmid).astype(pdt))

    # ---- (B) DarkConv #2 (3x3, padding=1) + residual for the PREVIOUS tile
    # (lag-by-one: its bottom halo row was just written by step (A)).
    # Three accumulating K=3*Cmid matmuls, one per kx; each needs a single
    # sublane-shifted slab read, the ky shifts are cheap outer-dim slices.
    @pl.when(r >= 1)
    def _conv2():
        base = pl.multiple_of((r - 1) * TH, TH)   # top-halo pad row of tile r-1
        y32 = None
        for dx in range(3):
            slab = pad_ref[pl.ds(base, TH + 2), pl.ds(dx, W), :]   # (TH+2, W, Cmid)
            col = jnp.concatenate([slab[dy:dy + TH] for dy in range(3)],
                                  axis=-1)                          # (TH, W, 3*Cmid)
            d = jnp.dot(col.reshape(TH * W, 3 * Cmid), w2_ref[dx],
                        preferred_element_type=jnp.float32)         # (TH*W, C)
            y32 = d if y32 is None else y32 + d
        y32 = y32 + b2_ref[...]
        y32 = jnp.where(y32 > 0, y32, 0.1 * y32)
        out_ref[0] = (xprev_ref[...] + y32).astype(out_ref.dtype)

    # ---- (C) stash this tile's x (f32) for next step's residual add.
    @pl.when(r < R)
    def _save_x():
        xprev_ref[...] = x_ref[0]


def _vmem_limit_bytes(H, W, C, Cmid, TH, x_itemsize):
    io_block = TH * W * C * x_itemsize
    pad = (H + 2) * (W + 2) * Cmid * 2                       # bf16 scratch
    weights = (C * Cmid + 9 * Cmid * C) * 2 + (Cmid + C) * 4
    work = TH * W * (3 * Cmid * 2 + 2 * C * 4)               # col (bf16) + f32 acc/out
    need = 5 * io_block + pad + weights + work               # 2x dbl-buffered in/out + xprev
    # generous headroom, but stay below v7x's 64 MiB physical VMEM.
    return int(min(max(2 * need + (16 << 20), 32 << 20), 56 << 20))


def dark_residual_nhwc(x_nhwc, kparams):
    """x_nhwc: (N, H, W, C) float32; kparams from fold_params()."""
    w1f, b1, w2g, b2 = kparams
    N, H, W, C = x_nhwc.shape
    Cmid = w1f.shape[1]
    TH = 8 if H % 8 == 0 else H              # rows per tile (multiple of 8 preferred)
    R = H // TH
    x2 = x_nhwc.reshape(N, H * W, C)         # contiguous -> free; kernel sees 2-D blocks
    y2 = pl.pallas_call(
        dark_residual_kernel,
        out_shape=jax.ShapeDtypeStruct((N, H * W, C), x_nhwc.dtype),
        grid_spec=pltpu.PrefetchScalarGridSpec(
            num_scalar_prefetch=0,
            grid=(N, R + 1),                 # +1 flush step for the lagged conv2
            in_specs=[
                pl.BlockSpec((1, TH * W, C),
                             lambda n, r: (n, jnp.minimum(r, R - 1), 0)),
                pl.BlockSpec((C, Cmid), lambda n, r: (0, 0)),
                pl.BlockSpec((1, Cmid), lambda n, r: (0, 0)),
                pl.BlockSpec((3, 3 * Cmid, C), lambda n, r: (0, 0, 0)),
                pl.BlockSpec((1, C), lambda n, r: (0, 0)),
            ],
            out_specs=pl.BlockSpec((1, TH * W, C),
                                   lambda n, r: (n, jnp.maximum(r - 1, 0), 0)),
            scratch_shapes=[
                pltpu.VMEM((H + 2, W + 2, Cmid), jnp.bfloat16),   # padded conv1 output
                pltpu.VMEM((TH * W, C), x_nhwc.dtype),            # previous tile's x
            ],
        ),
        compiler_params=pltpu.CompilerParams(
            dimension_semantics=("parallel", "arbitrary"),  # batch split on megacore;
            vmem_limit_bytes=_vmem_limit_bytes(             # rows carry scratch state
                H, W, C, Cmid, TH, x_nhwc.dtype.itemsize),
        ),
    )(x2, w1f, b1, w2g, b2)
    return y2.reshape(N, H, W, C)


def dark_residual(x_nchw, kparams):
    """x_nchw: (N, C, H, W) like PyTorch. Returns NCHW.
    TODO(synk): keep the whole network NHWC end-to-end in production; these
    transposes bracket every call with a full HBM read+write of x."""
    x_nhwc = jnp.transpose(x_nchw, (0, 2, 3, 1))
    y_nhwc = dark_residual_nhwc(x_nhwc, kparams)
    return jnp.transpose(y_nhwc, (0, 3, 1, 2))


def make_params(key, C):
    """Deterministic synthetic params matching DarkResidual(__init__) shapes."""
    Cmid = C // 2
    k1, k2, k3, k4 = jax.random.split(key, 4)
    eps = 1e-5

    # Conv1: torch weight (Cmid, C, 1, 1) ~ N(0, 0.02) -> (C, Cmid)
    w1_t = 0.02 * jax.random.normal(k1, (Cmid, C, 1, 1), jnp.float32)
    w1 = jnp.transpose(w1_t[:, :, 0, 0], (1, 0))
    # BN1: gamma ~ N(1, 0.02), beta = 0, running stats at init (mean=0, var=1)
    g1 = 1.0 + 0.02 * jax.random.normal(k2, (Cmid,), jnp.float32)
    s1 = (g1 / jnp.sqrt(1.0 + eps)).reshape(1, Cmid)
    b1 = jnp.zeros((1, Cmid), jnp.float32)

    # Conv2: torch weight (C, Cmid, 3, 3) ~ N(0, 0.02) -> HWIO (3, 3, Cmid, C)
    w2_t = 0.02 * jax.random.normal(k3, (C, Cmid, 3, 3), jnp.float32)
    w2_hwio = jnp.transpose(w2_t, (2, 3, 1, 0))
    g2 = 1.0 + 0.02 * jax.random.normal(k4, (C,), jnp.float32)
    s2 = (g2 / jnp.sqrt(1.0 + eps)).reshape(1, C)
    b2 = jnp.zeros((1, C), jnp.float32)

    return (w1, s1, b1, w2_hwio, s2, b2)


def fold_params(params):
    """Fold eval-mode BN scales into the conv weights; cast matmul weights to bf16."""
    w1, s1, b1, w2_hwio, s2, b2 = params
    Cmid, C = w2_hwio.shape[2], w2_hwio.shape[3]
    w1f = (w1 * s1).astype(jnp.bfloat16)                        # (C, Cmid)
    w2f = w2_hwio * s2.reshape(1, 1, 1, C)                      # fold BN2 per cout
    # (ky, kx, cin, cout) -> (kx, ky*cin, cout): grouped by kx, matching the
    # in-kernel (ky-stacked) concat order.
    w2g = jnp.transpose(w2f, (1, 0, 2, 3)).reshape(3, 3 * Cmid, C).astype(jnp.bfloat16)
    return (w1f, b1.astype(jnp.float32), w2g, b2.astype(jnp.float32))


def reference_nhwc(x, w1, s1, b1, w2_hwio, s2, b2):
    """Pure-JAX f32 reference for validation (same eval-mode BN semantics)."""
    h = jax.lax.conv_general_dilated(
        x, w1[None, None], (1, 1), 'VALID',
        dimension_numbers=('NHWC', 'HWIO', 'NHWC'))
    h = h * s1 + b1
    h = jnp.where(h > 0, h, 0.1 * h)
    y = jax.lax.conv_general_dilated(
        h, w2_hwio, (1, 1), ((1, 1), (1, 1)),
        dimension_numbers=('NHWC', 'HWIO', 'NHWC'))
    y = y * s2 + b2
    y = jnp.where(y > 0, y, 0.1 * y)
    return x + y


if __name__ == "__main__":
    key = jax.random.PRNGKey(0)
    kx, kp = jax.random.split(key)

    N, C, H, W = 2, 8, 16, 16          # inchannel=8 -> hidden 4
    x_nchw = jax.random.normal(kx, (N, C, H, W), jnp.float32)
    params = make_params(kp, C)
    kparams = fold_params(params)

    out = dark_residual(x_nchw, kparams)
    out = jax.block_until_ready(out)

    # validate against a pure-JAX f32 convolution reference (kernel uses bf16
    # MXU operands -> slightly looser tolerance than the pure-f32 version).
    x_nhwc = jnp.transpose(x_nchw, (0, 2, 3, 1))
    ref = jnp.transpose(reference_nhwc(x_nhwc, *params), (0, 3, 1, 2))
    assert out.shape == x_nchw.shape and out.dtype == x_nchw.dtype
    assert jnp.allclose(out, ref, atol=1e-2, rtol=1e-2), "mismatch vs reference"

    print("KERNEL_OK")
</pallas_src>

<mosaic_0001>
module attributes {stable_mosaic.version = 11 : i64} {
  func.func @dark_residual_kernel(%arg0: i32, %arg1: i32, %arg2: memref<1x128x8xf32, #tpu.memory_space<vmem>>, %arg3: memref<8x4xbf16, #tpu.memory_space<vmem>>, %arg4: memref<1x4xf32, #tpu.memory_space<vmem>>, %arg5: memref<3x12x8xbf16, #tpu.memory_space<vmem>>, %arg6: memref<1x8xf32, #tpu.memory_space<vmem>>, %arg7: memref<1x128x8xf32, #tpu.memory_space<vmem>>, %arg8: memref<18x18x4xbf16, #tpu.memory_space<vmem>>, %arg9: memref<128x8xf32, #tpu.memory_space<vmem>>) attributes {dimension_semantics = [#tpu.dimension_semantics<parallel>, #tpu.dimension_semantics<arbitrary>], iteration_bounds = array<i64: 2, 3>, scalar_prefetch = 0 : i64, scratch_operands = 2 : i64, tpu.core_type = #tpu.core_type<tc>, window_params = [{transform_indices = @transform_0, window_bounds = array<i64: 1, 128, 8>}, {pipeline_mode = #tpu.pipeline_mode<synchronous>, transform_indices = @transform_1, window_bounds = array<i64: 8, 4>}, {pipeline_mode = #tpu.pipeline_mode<synchronous>, transform_indices = @transform_2, window_bounds = array<i64: 1, 4>}, {pipeline_mode = #tpu.pipeline_mode<synchronous>, transform_indices = @transform_3, window_bounds = array<i64: 3, 12, 8>}, {pipeline_mode = #tpu.pipeline_mode<synchronous>, transform_indices = @transform_4, window_bounds = array<i64: 1, 8>}, {transform_indices = @transform_5, window_bounds = array<i64: 1, 128, 8>}]} {
    %c0_i32 = arith.constant 0 : i32
    %0 = arith.cmpi eq, %arg1, %c0_i32 : i32
    %1 = arith.extui %0 : i1 to i32
    %c0_i32_0 = arith.constant 0 : i32
    %2 = arith.cmpi ne, %1, %c0_i32_0 : i32
    scf.if %2 {
      %cst = arith.constant 0.000000e+00 : bf16
      %12 = vector.broadcast %cst : bf16 to vector<1x18x4xbf16>
      %c0 = arith.constant 0 : index
      %c0_5 = arith.constant 0 : index
      %c0_6 = arith.constant 0 : index
      %13 = vector.load %arg8[%c0, %c0_5, %c0_6] : memref<18x18x4xbf16, #tpu.memory_space<vmem>>, vector<1x18x4xbf16>
      tpu.vector_store %arg8[%c0, %c0_5, %c0_6], %12 {strides = array<i32>} : memref<18x18x4xbf16, #tpu.memory_space<vmem>>, vector<1x18x4xbf16>,
      %cst_7 = arith.constant 0.000000e+00 : bf16
      %14 = vector.broadcast %cst_7 : bf16 to vector<1x18x4xbf16>
      %c17 = arith.constant 17 : index
      %c0_8 = arith.constant 0 : index
      %c0_9 = arith.constant 0 : index
      %15 = vector.load %arg8[%c17, %c0_8, %c0_9] : memref<18x18x4xbf16, #tpu.memory_space<vmem>>, vector<1x18x4xbf16>
      tpu.vector_store %arg8[%c17, %c0_8, %c0_9], %14 {strides = array<i32>} : memref<18x18x4xbf16, #tpu.memory_space<vmem>>, vector<1x18x4xbf16>,
      %cst_10 = arith.constant 0.000000e+00 : bf16
      %16 = vector.broadcast %cst_10 : bf16 to vector<18x1x4xbf16>
      %c0_11 = arith.constant 0 : index
      %c0_12 = arith.constant 0 : index
      %c0_13 = arith.constant 0 : index
      %17 = vector.load %arg8[%c0_11, %c0_12, %c0_13] : memref<18x18x4xbf16, #tpu.memory_space<vmem>>, vector<18x1x4xbf16>
      tpu.vector_store %arg8[%c0_11, %c0_12, %c0_13], %16 {strides = array<i32>} : memref<18x18x4xbf16, #tpu.memory_space<vmem>>, vector<18x1x4xbf16>,
      %cst_14 = arith.constant 0.000000e+00 : bf16
      %18 = vector.broadcast %cst_14 : bf16 to vector<18x1x4xbf16>
      %c0_15 = arith.constant 0 : index
      %c17_16 = arith.constant 17 : index
      %c0_17 = arith.constant 0 : index
      %19 = vector.load %arg8[%c0_15, %c17_16, %c0_17] : memref<18x18x4xbf16, #tpu.memory_space<vmem>>, vector<18x1x4xbf16>
      tpu.vector_store %arg8[%c0_15, %c17_16, %c0_17], %18 {strides = array<i32>} : memref<18x18x4xbf16, #tpu.memory_space<vmem>>, vector<18x1x4xbf16>,
    } else {
    }
    %c2_i32 = arith.constant 2 : i32
    %3 = arith.cmpi slt, %arg1, %c2_i32 : i32
    %4 = arith.extui %3 : i1 to i32
    %c0_i32_1 = arith.constant 0 : i32
    %5 = arith.cmpi ne, %4, %c0_i32_1 : i32
    scf.if %5 {
      %c0 = arith.constant 0 : index
      %c0_5 = arith.constant 0 : index
      %c0_6 = arith.constant 0 : index
      %12 = vector.load %arg2[%c0, %c0_5, %c0_6] : memref<1x128x8xf32, #tpu.memory_space<vmem>>, vector<1x128x8xf32>
      %13 = vector.shape_cast %12 : vector<1x128x8xf32> to vector<128x8xf32>
      %14 = arith.truncf %13 : vector<128x8xf32> to vector<128x8xbf16>
      %c0_7 = arith.constant 0 : index
      %c0_8 = arith.constant 0 : index
      %15 = vector.load %arg3[%c0_7, %c0_8] : memref<8x4xbf16, #tpu.memory_space<vmem>>, vector<8x4xbf16>
      %cst = arith.constant dense<0.000000e+00> : vector<128x4xf32>
      %16 = tpu.matmul %14, %15, %cst {dimension_numbers = #tpu.dot_dimension_numbers<[1], [0], [0], [1], [0, 0, 1, 1], [], []>} : vector<128x8xbf16>, vector<8x4xbf16>, vector<128x4xf32> -> vector<128x4xf32>
      %c0_9 = arith.constant 0 : index
      %c0_10 = arith.constant 0 : index
      %17 = vector.load %arg4[%c0_9, %c0_10] : memref<1x4xf32, #tpu.memory_space<vmem>>, vector<1x4xf32>
      %18 = vector.broadcast %17 : vector<1x4xf32> to vector<128x4xf32>
      %19 = arith.addf %16, %18 : vector<128x4xf32>
      %cst_11 = arith.constant 0.000000e+00 : f32
      %20 = vector.broadcast %cst_11 : f32 to vector<128x4xf32>
      %21 = arith.cmpf ogt, %19, %20 : vector<128x4xf32>
      %cst_12 = arith.constant 1.000000e-01 : f32
      %22 = vector.broadcast %cst_12 : f32 to vector<128x4xf32>
      %23 = arith.mulf %22, %19 : vector<128x4xf32>
      %24 = arith.select %21, %19, %23 : vector<128x4xi1>, vector<128x4xf32>
      %c8_i32 = arith.constant 8 : i32
      %25 = arith.muli %arg1, %c8_i32 : i32
      %26 = tpu.assume_multiple %25, 8 : i32
      %c1_i32_13 = arith.constant 1 : i32
      %27 = arith.addi %26, %c1_i32_13 : i32
      %28 = vector.shape_cast %24 : vector<128x4xf32> to vector<8x16x4xf32>
      %29 = arith.truncf %28 : vector<8x16x4xf32> to vector<8x16x4xbf16>
      %30 = arith.index_cast %27 : i32 to index
      %c1 = arith.constant 1 : index
      %c0_14 = arith.constant 0 : index
      %31 = vector.load %arg8[%30, %c1, %c0_14] : memref<18x18x4xbf16, #tpu.memory_space<vmem>>, vector<8x16x4xbf16>
      tpu.vector_store %arg8[%30, %c1, %c0_14], %29 {strides = array<i32>} : memref<18x18x4xbf16, #tpu.memory_space<vmem>>, vector<8x16x4xbf16>,
    } else {
    }
    %c1_i32 = arith.constant 1 : i32
    %6 = arith.cmpi sge, %arg1, %c1_i32 : i32
    %7 = arith.extui %6 : i1 to i32
    %c0_i32_2 = arith.constant 0 : i32
    %8 = arith.cmpi ne, %7, %c0_i32_2 : i32
    scf.if %8 {
      %c1_i32_5 = arith.constant 1 : i32
      %12 = arith.subi %arg1, %c1_i32_5 : i32
      %c8_i32 = arith.constant 8 : i32
      %13 = arith.muli %12, %c8_i32 : i32
      %14 = tpu.assume_multiple %13, 8 : i32
      %15 = arith.index_cast %14 : i32 to index
      %c0 = arith.constant 0 : index
      %c0_6 = arith.constant 0 : index
      %16 = vector.load %arg8[%15, %c0, %c0_6] : memref<18x18x4xbf16, #tpu.memory_space<vmem>>, vector<10x16x4xbf16>
      %17 = vector.extract_strided_slice %16 {offsets = [0, 0, 0], sizes = [8, 16, 4], strides = [1, 1, 1]} : vector<10x16x4xbf16> to vector<8x16x4xbf16>
      %18 = vector.extract_strided_slice %16 {offsets = [1, 0, 0], sizes = [8, 16, 4], strides = [1, 1, 1]} : vector<10x16x4xbf16> to vector<8x16x4xbf16>
      %19 = vector.extract_strided_slice %16 {offsets = [2, 0, 0], sizes = [8, 16, 4], strides = [1, 1, 1]} : vector<10x16x4xbf16> to vector<8x16x4xbf16>
      %20 = tpu.concatenate %17, %18, %19 in 2 : vector<8x16x4xbf16>, vector<8x16x4xbf16>, vector<8x16x4xbf16> -> vector<8x16x12xbf16>
      %21 = vector.shape_cast %20 : vector<8x16x12xbf16> to vector<128x12xbf16>
      %c0_7 = arith.constant 0 : index
      %c0_8 = arith.constant 0 : index
      %c0_9 = arith.constant 0 : index
      %22 = vector.load %arg5[%c0_7, %c0_8, %c0_9] : memref<3x12x8xbf16, #tpu.memory_space<vmem>>, vector<1x12x8xbf16>
      %23 = vector.shape_cast %22 : vector<1x12x8xbf16> to vector<12x8xbf16>
      %cst = arith.constant dense<0.000000e+00> : vector<128x8xf32>
      %24 = tpu.matmul %21, %23, %cst {dimension_numbers = #tpu.dot_dimension_numbers<[1], [0], [0], [1], [0, 0, 1, 1], [], []>} : vector<128x12xbf16>, vector<12x8xbf16>, vector<128x8xf32> -> vector<128x8xf32>
      %25 = arith.index_cast %14 : i32 to index
      %c1 = arith.constant 1 : index
      %c0_10 = arith.constant 0 : index
      %26 = vector.load %arg8[%25, %c1, %c0_10] : memref<18x18x4xbf16, #tpu.memory_space<vmem>>, vector<10x16x4xbf16>
      %27 = vector.extract_strided_slice %26 {offsets = [0, 0, 0], sizes = [8, 16, 4], strides = [1, 1, 1]} : vector<10x16x4xbf16> to vector<8x16x4xbf16>
      %28 = vector.extract_strided_slice %26 {offsets = [1, 0, 0], sizes = [8, 16, 4], strides = [1, 1, 1]} : vector<10x16x4xbf16> to vector<8x16x4xbf16>
      %29 = vector.extract_strided_slice %26 {offsets = [2, 0, 0], sizes = [8, 16, 4], strides = [1, 1, 1]} : vector<10x16x4xbf16> to vector<8x16x4xbf16>
      %30 = tpu.concatenate %27, %28, %29 in 2 : vector<8x16x4xbf16>, vector<8x16x4xbf16>, vector<8x16x4xbf16> -> vector<8x16x12xbf16>
      %31 = vector.shape_cast %30 : vector<8x16x12xbf16> to vector<128x12xbf16>
      %c1_11 = arith.constant 1 : index
      %c0_12 = arith.constant 0 : index
      %c0_13 = arith.constant 0 : index
      %32 = vector.load %arg5[%c1_11, %c0_12, %c0_13] : memref<3x12x8xbf16, #tpu.memory_space<vmem>>, vector<1x12x8xbf16>
      %33 = vector.shape_cast %32 : vector<1x12x8xbf16> to vector<12x8xbf16>
      %cst_14 = arith.constant dense<0.000000e+00> : vector<128x8xf32>
      %34 = tpu.matmul %31, %33, %cst_14 {dimension_numbers = #tpu.dot_dimension_numbers<[1], [0], [0], [1], [0, 0, 1, 1], [], []>} : vector<128x12xbf16>, vector<12x8xbf16>, vector<128x8xf32> -> vector<128x8xf32>
      %35 = arith.addf %24, %34 : vector<128x8xf32>
      %36 = arith.index_cast %14 : i32 to index
      %c2 = arith.constant 2 : index
      %c0_15 = arith.constant 0 : index
      %37 = vector.load %arg8[%36, %c2, %c0_15] : memref<18x18x4xbf16, #tpu.memory_space<vmem>>, vector<10x16x4xbf16>
      %38 = vector.extract_strided_slice %37 {offsets = [0, 0, 0], sizes = [8, 16, 4], strides = [1, 1, 1]} : vector<10x16x4xbf16> to vector<8x16x4xbf16>
      %39 = vector.extract_strided_slice %37 {offsets = [1, 0, 0], sizes = [8, 16, 4], strides = [1, 1, 1]} : vector<10x16x4xbf16> to vector<8x16x4xbf16>
      %40 = vector.extract_strided_slice %37 {offsets = [2, 0, 0], sizes = [8, 16, 4], strides = [1, 1, 1]} : vector<10x16x4xbf16> to vector<8x16x4xbf16>
      %41 = tpu.concatenate %38, %39, %40 in 2 : vector<8x16x4xbf16>, vector<8x16x4xbf16>, vector<8x16x4xbf16> -> vector<8x16x12xbf16>
      %42 = vector.shape_cast %41 : vector<8x16x12xbf16> to vector<128x12xbf16>
      %c2_16 = arith.constant 2 : index
      %c0_17 = arith.constant 0 : index
      %c0_18 = arith.constant 0 : index
      %43 = vector.load %arg5[%c2_16, %c0_17, %c0_18] : memref<3x12x8xbf16, #tpu.memory_space<vmem>>, vector<1x12x8xbf16>
      %44 = vector.shape_cast %43 : vector<1x12x8xbf16> to vector<12x8xbf16>
      %cst_19 = arith.constant dense<0.000000e+00> : vector<128x8xf32>
      %45 = tpu.matmul %42, %44, %cst_19 {dimension_numbers = #tpu.dot_dimension_numbers<[1], [0], [0], [1], [0, 0, 1, 1], [], []>} : vector<128x12xbf16>, vector<12x8xbf16>, vector<128x8xf32> -> vector<128x8xf32>
      %46 = arith.addf %35, %45 : vector<128x8xf32>
      %c0_20 = arith.constant 0 : index
      %c0_21 = arith.constant 0 : index
      %47 = vector.load %arg6[%c0_20, %c0_21] : memref<1x8xf32, #tpu.memory_space<vmem>>, vector<1x8xf32>
      %48 = vector.broadcast %47 : vector<1x8xf32> to vector<128x8xf32>
      %49 = arith.addf %46, %48 : vector<128x8xf32>
      %cst_22 = arith.constant 0.000000e+00 : f32
      %50 = vector.broadcast %cst_22 : f32 to vector<128x8xf32>
      %51 = arith.cmpf ogt, %49, %50 : vector<128x8xf32>
      %cst_23 = arith.constant 1.000000e-01 : f32
      %52 = vector.broadcast %cst_23 : f32 to vector<128x8xf32>
      %53 = arith.mulf %52, %49 : vector<128x8xf32>
      %54 = arith.select %51, %49, %53 : vector<128x8xi1>, vector<128x8xf32>
      %c0_24 = arith.constant 0 : index
      %c0_25 = arith.constant 0 : index
      %55 = vector.load %arg9[%c0_24, %c0_25] : memref<128x8xf32, #tpu.memory_space<vmem>>, vector<128x8xf32>
      %56 = arith.addf %55, %54 : vector<128x8xf32>
      %c0_26 = arith.constant 0 : index
      %c0_27 = arith.constant 0 : index
      %c0_28 = arith.constant 0 : index
      %57 = vector.load %arg7[%c0_26, %c0_27, %c0_28] : memref<1x128x8xf32, #tpu.memory_space<vmem>>, vector<1x128x8xf32>
      %58 = vector.shape_cast %57 : vector<1x128x8xf32> to vector<128x8xf32>
      %59 = vector.shape_cast %56 : vector<128x8xf32> to vector<1x128x8xf32>
      tpu.vector_store %arg7[%c0_26, %c0_27, %c0_28], %59 {strides = array<i32>} : memref<1x128x8xf32, #tpu.memory_space<vmem>>, vector<1x128x8xf32>,
    } else {
    }
    %c2_i32_3 = arith.constant 2 : i32
    %9 = arith.cmpi slt, %arg1, %c2_i32_3 : i32
    %10 = arith.extui %9 : i1 to i32
    %c0_i32_4 = arith.constant 0 : i32
    %11 = arith.cmpi ne, %10, %c0_i32_4 : i32
    scf.if %11 {
      %c0 = arith.constant 0 : index
      %c0_5 = arith.constant 0 : index
      %c0_6 = arith.constant 0 : index
      %12 = vector.load %arg2[%c0, %c0_5, %c0_6] : memref<1x128x8xf32, #tpu.memory_space<vmem>>, vector<1x128x8xf32>
      %13 = vector.shape_cast %12 : vector<1x128x8xf32> to vector<128x8xf32>
      %c0_7 = arith.constant 0 : index
      %c0_8 = arith.constant 0 : index
      %14 = vector.load %arg9[%c0_7, %c0_8] : memref<128x8xf32, #tpu.memory_space<vmem>>, vector<128x8xf32>
      tpu.vector_store %arg9[%c0_7, %c0_8], %13 {strides = array<i32>} : memref<128x8xf32, #tpu.memory_space<vmem>>, vector<128x8xf32>,
    } else {
    }
    return
  }
  func.func @transform_0(%arg0: i32, %arg1: i32) -> (i32, i32, i32) {
    %c1_i32 = arith.constant 1 : i32
    %0 = arith.minsi %arg1, %c1_i32 : i32
    %c0_i32 = arith.constant 0 : i32
    %c0_i32_0 = arith.constant 0 : i32
    return %arg0, %0, %c0_i32 : i32, i32, i32
  }
  func.func @transform_1(%arg0: i32, %arg1: i32) -> (i32, i32) {
    %c0_i32 = arith.constant 0 : i32
    %c0_i32_0 = arith.constant 0 : i32
    %c0_i32_1 = arith.constant 0 : i32
    return %c0_i32, %c0_i32_0 : i32, i32
  }
  func.func @transform_2(%arg0: i32, %arg1: i32) -> (i32, i32) {
    %c0_i32 = arith.constant 0 : i32
    %c0_i32_0 = arith.constant 0 : i32
    %c0_i32_1 = arith.constant 0 : i32
    return %c0_i32, %c0_i32_0 : i32, i32
  }
  func.func @transform_3(%arg0: i32, %arg1: i32) -> (i32, i32, i32) {
    %c0_i32 = arith.constant 0 : i32
    %c0_i32_0 = arith.constant 0 : i32
    %c0_i32_1 = arith.constant 0 : i32
    %c0_i32_2 = arith.constant 0 : i32
    return %c0_i32, %c0_i32_0, %c0_i32_1 : i32, i32, i32
  }
  func.func @transform_4(%arg0: i32, %arg1: i32) -> (i32, i32) {
    %c0_i32 = arith.constant 0 : i32
    %c0_i32_0 = arith.constant 0 : i32
    %c0_i32_1 = arith.constant 0 : i32
    return %c0_i32, %c0_i32_0 : i32, i32
  }
  func.func @transform_5(%arg0: i32, %arg1: i32) -> (i32, i32, i32) {
    %c1_i32 = arith.constant 1 : i32
    %0 = arith.subi %arg1, %c1_i32 : i32
    %c0_i32 = arith.constant 0 : i32
    %1 = arith.maxsi %0, %c0_i32 : i32
    %c0_i32_0 = arith.constant 0 : i32
    %c0_i32_1 = arith.constant 0 : i32
    return %arg0, %1, %c0_i32_0 : i32, i32, i32
  }
}

</mosaic_0001>

<llo_original>
// kernel: tpu_custom_call.1
$region0: #{tpu_custom_call.1}
  #allocation0 [shape = 'u32[]', space=smem, size = 0x4, offset = 0x4, fixed_abs, tag = 'smem constant byte address 0x4 - core index']
  #allocation1 [shape = 'u32[144,128]{1,0:T(1,128)}', space=vmem, size = 0x12000, scoped, tag = 'internal scratch']
  #allocation2 [shape = 'bf16[18,18,4]{2,1,0:T(8,128)(2,1)}', space=vmem, size = 0x1b000, scoped, tag = 'scratch operand']
  #allocation3 [shape = 'f32[128,8]{1,0:T(8,128)}', space=vmem, size = 0x10000, scoped, tag = 'scratch operand']
  %s0 = inlined_call_operand.vmem [shape: f32[2,256,8], index: 0, kind: input, shape index: {}]
  %s1 = inlined_call_operand.vmem [shape: bf16[8,4], index: 1, kind: input, shape index: {}]
  %s2 = inlined_call_operand.vmem [shape: f32[1,4], index: 2, kind: input, shape index: {}]
  %s3 = inlined_call_operand.vmem [shape: bf16[3,12,8], index: 3, kind: input, shape index: {}]
  %s4 = inlined_call_operand.vmem [shape: f32[1,8], index: 4, kind: input, shape index: {}]
  %s5 = inlined_call_operand.vmem [shape: f32[2,256,8], index: 5, kind: output, shape index: {}]
  %s6 = sld [smem:[#allocation0]]
  $region69: #{tpu_custom_call.1} parent=0
    _
  %s8 = ssub.s32 1, %s6
  %s9 = scalar_select 0, %s8, %s6
  loop: start=0, step=1, limit=8
  $region2: #{tpu_custom_call.1} parent=0 // loop_pre_header
    _
  $region3: #{tpu_custom_call.1} parent=0 // loop_header
    %s11 = sphi 0, %s15
    %p12 = scmp.ge.s32.totalorder %s11, 8
    %s18 = sphi 0, %s30
    %s19 = sphi 0, %s26
    %s20 = sphi 0, %s18
    %s21 = sphi 0, %s19
    %s22 = sphi 0, %s20
    %s23 = sphi 0, %s21
    %s39 = sphi 0, %s41
    %s42 = sphi 0, %s39
    %s43 = sphi 0, %s42
    %s59 = sphi 0, %s43
    %s63 = sphi 0, %s63
    %s65 = sphi 0, %s63
    %s66 = sphi 0, %s65
    %s80 = sphi 0, %s66
    %s84 = sphi 0, %s84
    %s86 = sphi 0, %s84
    %s87 = sphi 0, %s86
    %s101 = sphi 0, %s87
    %s105 = sphi 0, %s105
    %s107 = sphi 0, %s105
    %s108 = sphi 0, %s107
    %s122 = sphi 0, %s108
    %s126 = sphi 0, %s126
    %s128 = sphi 0, %s126
    %s129 = sphi 0, %s128
    %s143 = sphi 0, %s129
    %s157 = sphi 0, %s159
    %s160 = sphi 0, %s157
    %s161 = sphi 0, %s160
    %s177 = sphi 0, %s161
  $region4: #{tpu_custom_call.1} parent=0 // loop_header_branch
    %14 = sbr.rel (%p12) target = $region8
  $region5: #{tpu_custom_call.1} parent=0 // loop_body
    %s16 = ssub.s32 %s11, 1
    %s17 = ssub.s32 %s11, 2
    %s24 = sadd.s32 1, %s19
    %p25 = scmp.ge.s32.totalorder %s24, 3
    %s26 = scalar_select %p25, 0, %s24
    %s27 = sadd.s32 1, %s18
    %s28 = scalar_select %p25, %s27, %s18
    %p29 = scmp.ge.s32.totalorder %s28, 2
    %s30 = scalar_select %p29, 0, %s28
    %p31 = scmp.lt.s32.totalorder %s19, 1
    %s32 = scalar_select %p31, %s19, 1
    %p33 = scmp.lt.s32.totalorder %s26, 1
    %s34 = scalar_select %p33, %s26, 1
    %s35 = ssub.s32 %s18, %s30
    %s36 = ssub.s32 %s32, %s34
    %s37 = sor.u32 %s35, %s36
    %p38 = scmp.eq.s32.totalorder %s37, 0
    %s40 = sadd.s32 %s39, 1
    %s41 = scalar_select %p38, %s39, %s40
    %p44 = pneg %p38
    %p45 = scmp.eq.s32.totalorder %s11, 5
    %p46 = por %p44, %p45
    %p47 = scmp.ne.s32.totalorder %s39, %s42
    %p48 = scmp.eq.s32.totalorder %s11, 0
    %p49 = por %p47, %p48
    %p50 = scmp.ne.s32.totalorder %s39, %s42
    %p51 = scmp.eq.s32.totalorder %s16, 5
    %p52 = por %p50, %p51
    %p53 = scmp.ne.s32.totalorder %s42, %s43
    %p54 = scmp.eq.s32.totalorder %s16, 0
    %p55 = por %p53, %p54
    %p56 = scmp.ne.s32.totalorder %s42, %s43
    %p57 = scmp.eq.s32.totalorder %s17, 5
    %p58 = por %p56, %p57
    %p60 = scmp.ne.s32.totalorder %s43, %s59
    %p61 = scmp.eq.s32.totalorder %s17, 0
    %p62 = por %p60, %p61
    %s64 = sadd.s32 %s63, 1
    %p67 = scmp.eq.s32.totalorder %s11, 5
    %p68 = scmp.ne.s32.totalorder %s63, %s65
    %p69 = scmp.eq.s32.totalorder %s11, 0
    %p70 = por %p68, %p69
    %p71 = scmp.ne.s32.totalorder %s63, %s65
    %p72 = scmp.eq.s32.totalorder %s16, 5
    %p73 = por %p71, %p72
    %p74 = scmp.ne.s32.totalorder %s65, %s66
    %p75 = scmp.eq.s32.totalorder %s16, 0
    %p76 = por %p74, %p75
    %p77 = scmp.ne.s32.totalorder %s65, %s66
    %p78 = scmp.eq.s32.totalorder %s17, 5
    %p79 = por %p77, %p78
    %p81 = scmp.ne.s32.totalorder %s66, %s80
    %p82 = scmp.eq.s32.totalorder %s17, 0
    %p83 = por %p81, %p82
    %s85 = sadd.s32 %s84, 1
    %p88 = scmp.eq.s32.totalorder %s11, 5
    %p89 = scmp.ne.s32.totalorder %s84, %s86
    %p90 = scmp.eq.s32.totalorder %s11, 0
    %p91 = por %p89, %p90
    %p92 = scmp.ne.s32.totalorder %s84, %s86
    %p93 = scmp.eq.s32.totalorder %s16, 5
    %p94 = por %p92, %p93
    %p95 = scmp.ne.s32.totalorder %s86, %s87
    %p96 = scmp.eq.s32.totalorder %s16, 0
    %p97 = por %p95, %p96
    %p98 = scmp.ne.s32.totalorder %s86, %s87
    %p99 = scmp.eq.s32.totalorder %s17, 5
    %p100 = por %p98, %p99
    %p102 = scmp.ne.s32.totalorder %s87, %s101
    %p103 = scmp.eq.s32.totalorder %s17, 0
    %p104 = por %p102, %p103
    %s106 = sadd.s32 %s105, 1
    %p109 = scmp.eq.s32.totalorder %s11, 5
    %p110 = scmp.ne.s32.totalorder %s105, %s107
    %p111 = scmp.eq.s32.totalorder %s11, 0
    %p112 = por %p110, %p111
    %p113 = scmp.ne.s32.totalorder %s105, %s107
    %p114 = scmp.eq.s32.totalorder %s16, 5
    %p115 = por %p113, %p114
    %p116 = scmp.ne.s32.totalorder %s107, %s108
    %p117 = scmp.eq.s32.totalorder %s16, 0
    %p118 = por %p116, %p117
    %p119 = scmp.ne.s32.totalorder %s107, %s108
    %p120 = scmp.eq.s32.totalorder %s17, 5
    %p121 = por %p119, %p120
    %p123 = scmp.ne.s32.totalorder %s108, %s122
    %p124 = scmp.eq.s32.totalorder %s17, 0
    %p125 = por %p123, %p124
    %s127 = sadd.s32 %s126, 1
    %p130 = scmp.eq.s32.totalorder %s11, 5
    %p131 = scmp.ne.s32.totalorder %s126, %s128
    %p132 = scmp.eq.s32.totalorder %s11, 0
    %p133 = por %p131, %p132
    %p134 = scmp.ne.s32.totalorder %s126, %s128
    %p135 = scmp.eq.s32.totalorder %s16, 5
    %p136 = por %p134, %p135
    %p137 = scmp.ne.s32.totalorder %s128, %s129
    %p138 = scmp.eq.s32.totalorder %s16, 0
    %p139 = por %p137, %p138
    %p140 = scmp.ne.s32.totalorder %s128, %s129
    %p141 = scmp.eq.s32.totalorder %s17, 5
    %p142 = por %p140, %p141
    %p144 = scmp.ne.s32.totalorder %s129, %s143
    %p145 = scmp.eq.s32.totalorder %s17, 0
    %p146 = por %p144, %p145
    %s147 = ssub.s32 %s19, 1
    %p148 = scmp.gt.s32.totalorder %s147, 0
    %s149 = scalar_select %p148, %s147, 0
    %s150 = ssub.s32 %s26, 1
    %p151 = scmp.gt.s32.totalorder %s150, 0
    %s152 = scalar_select %p151, %s150, 0
    %s153 = ssub.s32 %s18, %s30
    %s154 = ssub.s32 %s149, %s152
    %s155 = sor.u32 %s153, %s154
    %p156 = scmp.eq.s32.totalorder %s155, 0
    %s158 = sadd.s32 %s157, 1
    %s159 = scalar_select %p156, %s157, %s158
    %p162 = pneg %p156
    %p163 = scmp.eq.s32.totalorder %s11, 5
    %p164 = por %p162, %p163
    %p165 = scmp.ne.s32.totalorder %s157, %s160
    %p166 = scmp.eq.s32.totalorder %s11, 0
    %p167 = por %p165, %p166
    %p168 = scmp.ne.s32.totalorder %s157, %s160
    %p169 = scmp.eq.s32.totalorder %s16, 5
    %p170 = por %p168, %p169
    %p171 = scmp.ne.s32.totalorder %s160, %s161
    %p172 = scmp.eq.s32.totalorder %s16, 0
    %p173 = por %p171, %p172
    %p174 = scmp.ne.s32.totalorder %s160, %s161
    %p175 = scmp.eq.s32.totalorder %s17, 5
    %p176 = por %p174, %p175
    %p178 = scmp.ne.s32.totalorder %s161, %s177
    %p179 = scmp.eq.s32.totalorder %s17, 0
    %p180 = por %p178, %p179
    %p181 = scmp.le.s32.totalorder 1, %s11
    %p182 = scmp.lt.s32.totalorder %s11, 7
    %p183 = pnand %p181, %p182
    %p184 = pneg %p183
    // Predicated region
    $region9: #{tpu_custom_call.1} parent=5 // pred_check
      _
    $region10: #{tpu_custom_call.1} parent=5 // pred_check_branch
      %186 = sbr.rel (%p183) target = $region12
    $region11: #{tpu_custom_call.1} parent=5 // pred_region
      %s187 = ssub.s32 %s11, 1
      // Predicated region
      $region13: #{tpu_custom_call.1} parent=11 // pred_check
        %p188 = pneg %p76
      $region14: #{tpu_custom_call.1} parent=11 // pred_check_branch
        %190 = sbr.rel (%p188) target = $region16
      $region15: #{tpu_custom_call.1} parent=11 // pred_region
        _
      $region16: #{tpu_custom_call.1} parent=11 // pred_fallthru
        _
      // Predicated region
      $region17: #{tpu_custom_call.1} parent=11 // pred_check
        %p191 = pneg %p97
      $region18: #{tpu_custom_call.1} parent=11 // pred_check_branch
        %193 = sbr.rel (%p191) target = $region20
      $region19: #{tpu_custom_call.1} parent=11 // pred_region
        _
      $region20: #{tpu_custom_call.1} parent=11 // pred_fallthru
        _
      // Predicated region
      $region21: #{tpu_custom_call.1} parent=11 // pred_check
        %p194 = pneg %p118
      $region22: #{tpu_custom_call.1} parent=11 // pred_check_branch
        %196 = sbr.rel (%p194) target = $region24
      $region23: #{tpu_custom_call.1} parent=11 // pred_region
        _
      $region24: #{tpu_custom_call.1} parent=11 // pred_fallthru
        _
      // Predicated region
      $region25: #{tpu_custom_call.1} parent=11 // pred_check
        %p197 = pneg %p139
      $region26: #{tpu_custom_call.1} parent=11 // pred_check_branch
        %199 = sbr.rel (%p197) target = $region28
      $region27: #{tpu_custom_call.1} parent=11 // pred_region
        _
      $region28: #{tpu_custom_call.1} parent=11 // pred_fallthru
        _
    $region12: #{tpu_custom_call.1} parent=5 // pred_fallthru
      _
    %p200 = scmp.lt.s32.totalorder %s11, 6
    // Predicated region
    $region29: #{tpu_custom_call.1} parent=5 // pred_check
      %p201 = pneg %p200
    $region30: #{tpu_custom_call.1} parent=5 // pred_check_branch
      %203 = sbr.rel (%p201) target = $region32
    $region31: #{tpu_custom_call.1} parent=5 // pred_region
      // Predicated region
      $region33: #{tpu_custom_call.1} parent=31 // pred_check
        %p204 = pneg %p49
      $region34: #{tpu_custom_call.1} parent=31 // pred_check_branch
        %206 = sbr.rel (%p204) target = $region36
      $region35: #{tpu_custom_call.1} parent=31 // pred_region
        %p207 = scmp.lt.s32.totalorder %s19, 1
        %s208 = scalar_select %p207, %s19, 1
        %s209 = smul.u32 16, %s208
        %p210 = scmp.lt.s32.totalorder %s18, 1
        %s211 = scalar_select %p210, %s18, 1
        %p212 = scmp.lt.s32.totalorder %s209, 31
        %s213 = scalar_select %p212, %s209, 31
        %s214 = smul.addr %s211, 32
        %s215 = sadd.s32 %s213, %s214
        %s216 = smul.addr %s215, 8
        %s217 = scalar_lea.vmem %s0, %s216
        %p218 = scmp.lt.s32.totalorder %s19, 1
        %s219 = scalar_select %p218, %s19, 1
        %s220 = smul.u32 16, %s219
      $region36: #{tpu_custom_call.1} parent=31 // pred_fallthru
        _
    $region32: #{tpu_custom_call.1} parent=5 // pred_fallthru
      _
    %p221 = scmp.le.s32.totalorder 1, %s11
    %p222 = scmp.lt.s32.totalorder %s11, 7
    %p223 = pnand %p221, %p222
    %p224 = pneg %p223
    // Predicated region
    $region37: #{tpu_custom_call.1} parent=5 // pred_check
      _
    $region38: #{tpu_custom_call.1} parent=5 // pred_check_branch
      %226 = sbr.rel (%p223) target = $region40
    $region39: #{tpu_custom_call.1} parent=5 // pred_region
      %s227 = ssub.s32 %s11, 1
      %p228 = scmp.lt.s32.totalorder %s21, 1
      %s229 = scalar_select %p228, %s21, 1
      %s230 = smul.u32 16, %s229
      %p231 = scmp.lt.s32.totalorder %s20, 1
      %s232 = scalar_select %p231, %s20, 1
      %p233 = scmp.lt.s32.totalorder %s230, 31
      %s234 = scalar_select %p233, %s230, 31
      %s235 = smul.addr %s232, 32
      %s236 = sadd.s32 %s234, %s235
      %s237 = smul.addr %s236, 8
      %s238 = scalar_lea.vmem %s0, %s237
      %p239 = pneg %p55
      %p240 = pneg %p52
      %p241 = pneg %p76
      %p242 = pneg %p73
      %p243 = pneg %p97
      %p244 = pneg %p94
      %p245 = pneg %p118
      %p246 = pneg %p115
      %p247 = pneg %p139
      %p248 = pneg %p136
      %p249 = pneg %p173
      %p250 = pneg %p170
      %s251 = ssub.s32 %s21, 1
      %p252 = scmp.gt.s32.totalorder %s251, 0
      %s253 = scalar_select %p252, %s251, 0
      %s254 = smul.u32 16, %s253
      %p255 = scmp.lt.s32.totalorder %s20, 1
      %s256 = scalar_select %p255, %s20, 1
      %p257 = scmp.lt.s32.totalorder %s254, 31
      %s258 = scalar_select %p257, %s254, 31
      %s259 = smul.addr %s256, 32
      %s260 = sadd.s32 %s258, %s259
      %s261 = smul.addr %s260, 8
      %s262 = scalar_lea.vmem %s5, %s261
      %p263 = scmp.lt.s32.totalorder %s21, 1
      %s264 = scalar_select %p263, %s21, 1
      %s265 = smul.u32 16, %s264
      %p266 = scmp.lt.s32.totalorder %s20, 1
      %s267 = scalar_select %p266, %s20, 1
      %p268 = scmp.lt.s32.totalorder %s265, 31
      %s269 = scalar_select %p268, %s265, 31
      %s270 = smul.addr %s267, 32
      %s271 = sadd.s32 %s269, %s270
      %s272 = smul.addr %s271, 8
      %s273 = scalar_lea.vmem %s0, %s272
      %p274 = scmp.lt.s32.totalorder %s21, 1
      %s275 = scalar_select %p274, %s21, 1
      %s276 = smul.u32 16, %s275
      %s277 = ssub.s32 %s21, 1
      %p278 = scmp.gt.s32.totalorder %s277, 0
      %s279 = scalar_select %p278, %s277, 0
      %s280 = smul.u32 16, %s279
      %p281 = scmp.lt.s32.totalorder %s20, 1
      %s282 = scalar_select %p281, %s20, 1
      %p283 = scmp.lt.s32.totalorder %s280, 31
      %s284 = scalar_select %p283, %s280, 31
      %s285 = smul.addr %s282, 32
      %s286 = sadd.s32 %s284, %s285
      %s287 = smul.addr %s286, 8
      %s288 = scalar_lea.vmem %s5, %s287
      %s289 = ssub.s32 %s21, 1
      %p290 = scmp.gt.s32.totalorder %s289, 0
      %s291 = scalar_select %p290, %s289, 0
      %s292 = smul.u32 16, %s291
      %p294 = scmp.eq.s32.totalorder %s21, 0
      // Predicated region
      $region41: #{tpu_custom_call.1} parent=39 // pred_check
        %p295 = pneg %p294
      $region42: #{tpu_custom_call.1} parent=39 // pred_check_branch
        %297 = sbr.rel (%p295) target = $region44
      $region43: #{tpu_custom_call.1} parent=39 // pred_region
        %vm298 = vcmask 27648
        %299 = vst.msk [vmem:[#allocation2] sm:$0xf] %vm298, 0
        %300 = vst.msk [vmem:[#allocation2 + $0x4] sm:$0xf] %vm298, 0
        %vm301 = vcmask 24576
        %302 = vst.msk [vmem:[#allocation2 + $0x8] sm:$0x1] %vm301, 0
        %s303 = scalar_lea.vmem [#allocation2], 204
        %304 = vst.msk [vmem:[%s303] sm:$0xf] %vm298, 0
        %305 = vst.msk [vmem:[%s303 + $0x4] sm:$0xf] %vm298, 0
        %306 = vst.msk [vmem:[%s303 + $0x8] sm:$0x1] %vm301, 0
        %vm307 = vcmask 24576
        %vm308 = vsmask.f32 256
        %vm309 = vmand %vm307, %vm308
        %v310 = vld [vmem:[#allocation2] sm:$0x1]
        %v311 = vsel %vm309, 0, %v310
        %312 = vst [vmem:[#allocation2] sm:$0x1] %v311
        %v313 = vld [vmem:[#allocation2 + $0xc] sm:$0x1]
        %v314 = vsel %vm309, 0, %v313
        %315 = vst [vmem:[#allocation2 + $0xc] sm:$0x1] %v314
        %v316 = vld [vmem:[#allocation2 + $0x18] sm:$0x1]
        %v317 = vsel %vm309, 0, %v316
        %318 = vst [vmem:[#allocation2 + $0x18] sm:$0x1] %v317
        %v319 = vld [vmem:[#allocation2 + $0x24] sm:$0x1]
        %v320 = vsel %vm309, 0, %v319
        %321 = vst [vmem:[#allocation2 + $0x24] sm:$0x1] %v320
        %v322 = vld [vmem:[#allocation2 + $0x30] sm:$0x1]
        %v323 = vsel %vm309, 0, %v322
        %324 = vst [vmem:[#allocation2 + $0x30] sm:$0x1] %v323
        %v325 = vld [vmem:[#allocation2 + $0x3c] sm:$0x1]
        %v326 = vsel %vm309, 0, %v325
        %327 = vst [vmem:[#allocation2 + $0x3c] sm:$0x1] %v326
        %v328 = vld [vmem:[#allocation2 + $0x48] sm:$0x1]
        %v329 = vsel %vm309, 0, %v328
        %330 = vst [vmem:[#allocation2 + $0x48] sm:$0x1] %v329
        %v331 = vld [vmem:[#allocation2 + $0x54] sm:$0x1]
        %v332 = vsel %vm309, 0, %v331
        %333 = vst [vmem:[#allocation2 + $0x54] sm:$0x1] %v332
        %v334 = vld [vmem:[#allocation2 + $0x60] sm:$0x1]
        %v335 = vsel %vm309, 0, %v334
        %336 = vst [vmem:[#allocation2 + $0x60] sm:$0x1] %v335
        %v337 = vld [vmem:[#allocation2 + $0x6c] sm:$0x1]
        %v338 = vsel %vm309, 0, %v337
        %339 = vst [vmem:[#allocation2 + $0x6c] sm:$0x1] %v338
        %v340 = vld [vmem:[#allocation2 + $0x78] sm:$0x1]
        %v341 = vsel %vm309, 0, %v340
        %342 = vst [vmem:[#allocation2 + $0x78] sm:$0x1] %v341
        %v343 = vld [vmem:[#allocation2 + $0x84] sm:$0x1]
        %v344 = vsel %vm309, 0, %v343
        %345 = vst [vmem:[#allocation2 + $0x84] sm:$0x1] %v344
        %v346 = vld [vmem:[#allocation2 + $0x90] sm:$0x1]
        %v347 = vsel %vm309, 0, %v346
        %348 = vst [vmem:[#allocation2 + $0x90] sm:$0x1] %v347
        %v349 = vld [vmem:[#allocation2 + $0x9c] sm:$0x1]
        %v350 = vsel %vm309, 0, %v349
        %351 = vst [vmem:[#allocation2 + $0x9c] sm:$0x1] %v350
        %v352 = vld [vmem:[#allocation2 + $0xa8] sm:$0x1]
        %v353 = vsel %vm309, 0, %v352
        %354 = vst [vmem:[#allocation2 + $0xa8] sm:$0x1] %v353
        %v355 = vld [vmem:[#allocation2 + $0xb4] sm:$0x1]
        %v356 = vsel %vm309, 0, %v355
        %357 = vst [vmem:[#allocation2 + $0xb4] sm:$0x1] %v356
        %v358 = vld [vmem:[#allocation2 + $0xc0] sm:$0x1]
        %v359 = vsel %vm309, 0, %v358
        %360 = vst [vmem:[#allocation2 + $0xc0] sm:$0x1] %v359
        %v361 = vld [vmem:[#allocation2 + $0xcc] sm:$0x1]
        %v362 = vsel %vm309, 0, %v361
        %363 = vst [vmem:[#allocation2 + $0xcc] sm:$0x1] %v362
        %vm364 = vsmask.f32 7938
        %vm365 = vmand %vm307, %vm364
        %v366 = vld [vmem:[#allocation2 + $0x8] sm:$0x1]
        %v367 = vsel %vm365, 0, %v366
        %368 = vst [vmem:[#allocation2 + $0x8] sm:$0x1] %v367
        %v369 = vld [vmem:[#allocation2 + $0x14] sm:$0x1]
        %v370 = vsel %vm365, 0, %v369
        %371 = vst [vmem:[#allocation2 + $0x14] sm:$0x1] %v370
        %v372 = vld [vmem:[#allocation2 + $0x20] sm:$0x1]
        %v373 = vsel %vm365, 0, %v372
        %374 = vst [vmem:[#allocation2 + $0x20] sm:$0x1] %v373
        %v375 = vld [vmem:[#allocation2 + $0x2c] sm:$0x1]
        %v376 = vsel %vm365, 0, %v375
        %377 = vst [vmem:[#allocation2 + $0x2c] sm:$0x1] %v376
        %v378 = vld [vmem:[#allocation2 + $0x38] sm:$0x1]
        %v379 = vsel %vm365, 0, %v378
        %380 = vst [vmem:[#allocation2 + $0x38] sm:$0x1] %v379
        %v381 = vld [vmem:[#allocation2 + $0x44] sm:$0x1]
        %v382 = vsel %vm365, 0, %v381
        %383 = vst [vmem:[#allocation2 + $0x44] sm:$0x1] %v382
        %v384 = vld [vmem:[#allocation2 + $0x50] sm:$0x1]
        %v385 = vsel %vm365, 0, %v384
        %386 = vst [vmem:[#allocation2 + $0x50] sm:$0x1] %v385
        %v387 = vld [vmem:[#allocation2 + $0x5c] sm:$0x1]
        %v388 = vsel %vm365, 0, %v387
        %389 = vst [vmem:[#allocation2 + $0x5c] sm:$0x1] %v388
        %v390 = vld [vmem:[#allocation2 + $0x68] sm:$0x1]
        %v391 = vsel %vm365, 0, %v390
        %392 = vst [vmem:[#allocation2 + $0x68] sm:$0x1] %v391
        %v393 = vld [vmem:[#allocation2 + $0x74] sm:$0x1]
        %v394 = vsel %vm365, 0, %v393
        %395 = vst [vmem:[#allocation2 + $0x74] sm:$0x1] %v394
        %v396 = vld [vmem:[#allocation2 + $0x80] sm:$0x1]
        %v397 = vsel %vm365, 0, %v396
        %398 = vst [vmem:[#allocation2 + $0x80] sm:$0x1] %v397
        %v399 = vld [vmem:[#allocation2 + $0x8c] sm:$0x1]
        %v400 = vsel %vm365, 0, %v399
        %401 = vst [vmem:[#allocation2 + $0x8c] sm:$0x1] %v400
        %v402 = vld [vmem:[#allocation2 + $0x98] sm:$0x1]
        %v403 = vsel %vm365, 0, %v402
        %404 = vst [vmem:[#allocation2 + $0x98] sm:$0x1] %v403
        %v405 = vld [vmem:[#allocation2 + $0xa4] sm:$0x1]
        %v406 = vsel %vm365, 0, %v405
        %407 = vst [vmem:[#allocation2 + $0xa4] sm:$0x1] %v406
        %v408 = vld [vmem:[#allocation2 + $0xb0] sm:$0x1]
        %v409 = vsel %vm365, 0, %v408
        %410 = vst [vmem:[#allocation2 + $0xb0] sm:$0x1] %v409
        %v411 = vld [vmem:[#allocation2 + $0xbc] sm:$0x1]
        %v412 = vsel %vm365, 0, %v411
        %413 = vst [vmem:[#allocation2 + $0xbc] sm:$0x1] %v412
        %v414 = vld [vmem:[#allocation2 + $0xc8] sm:$0x1]
        %v415 = vsel %vm365, 0, %v414
        %416 = vst [vmem:[#allocation2 + $0xc8] sm:$0x1] %v415
        %v417 = vld [vmem:[#allocation2 + $0xd4] sm:$0x1]
        %v418 = vsel %vm365, 0, %v417
        %419 = vst [vmem:[#allocation2 + $0xd4] sm:$0x1] %v418
      $region44: #{tpu_custom_call.1} parent=39 // pred_fallthru
        _
      %p420 = scmp.lt.s32.totalorder %s21, 2
      // Predicated region
      $region45: #{tpu_custom_call.1} parent=39 // pred_check
        %p421 = pneg %p420
      $region46: #{tpu_custom_call.1} parent=39 // pred_check_branch
        %423 = sbr.rel (%p421) target = $region48
      $region47: #{tpu_custom_call.1} parent=39 // pred_region
        %v424 = vld [vmem:[%s273] sm:$0xff]
        %v425 = vld [vmem:[%s273 + $0x8] sm:$0xff]
        %v426 = vld [vmem:[%s273 + $0x10] sm:$0xff]
        %v427 = vld [vmem:[%s273 + $0x18] sm:$0xff]
        %v428 = vld [vmem:[%s273 + $0x20] sm:$0xff]
        %v429 = vld [vmem:[%s273 + $0x28] sm:$0xff]
        %v430 = vld [vmem:[%s273 + $0x30] sm:$0xff]
        %v431 = vld [vmem:[%s273 + $0x38] sm:$0xff]
        %v432 = vld [vmem:[%s273 + $0x40] sm:$0xff]
        %v433 = vld [vmem:[%s273 + $0x48] sm:$0xff]
        %v434 = vld [vmem:[%s273 + $0x50] sm:$0xff]
        %v435 = vld [vmem:[%s273 + $0x58] sm:$0xff]
        %v436 = vld [vmem:[%s273 + $0x60] sm:$0xff]
        %v437 = vld [vmem:[%s273 + $0x68] sm:$0xff]
        %v438 = vld [vmem:[%s273 + $0x70] sm:$0xff]
        %v439 = vld [vmem:[%s273 + $0x78] sm:$0xff]
        %v440 = vpack.c.bf16 %v425, %v424
        %v441 = vpack.c.bf16 %v427, %v426
        %v442 = vpack.c.bf16 %v429, %v428
        %v443 = vpack.c.bf16 %v431, %v430
        %v444 = vpack.c.bf16 %v433, %v432
        %v445 = vpack.c.bf16 %v435, %v434
        %v446 = vpack.c.bf16 %v437, %v436
        %v447 = vpack.c.bf16 %v439, %v438
        %v448 = vld [vmem:[%s1] sm:$0xf]
        %v449 = vld [vmem:[%s2] sm:$0x1]
        %v451 = vlaneseq
        %v452 = vshrl.u32 %v451, 7
        %v453 = vsub.s32 0, %v452
        %v454 = vrot.slane %v449, %v453
        %vm456 = vcmask 64512
        %v458 = vsel %vm456, %v440, 0
        %v461 = vsel %vm456, %v441, 0
        %v464 = vsel %vm456, %v442, 0
        %v467 = vsel %vm456, %v443, 0
        %v470 = vsel %vm456, %v444, 0
        %v473 = vsel %vm456, %v445, 0
        %v476 = vsel %vm456, %v446, 0
        %v479 = vsel %vm456, %v447, 0
        %vm481 = vcmask 1043456
        %v483 = vsel %vm481, %v448, 0
        %485 = vmatprep.subr.bf16.mxu0 0
        %486 = vmatpush1.bf16.msra.mxu0 %v483
        %487 = vmatprep.subr.bf16.mxu0 0
        %488 = vmatpush1.bf16.msra.mxu0 0
        %489 = vmatprep.subr.bf16.mxu0 0
        %490 = vmatpush1.bf16.msra.mxu0 0
        %491 = vmatprep.subr.bf16.mxu0 0
        %492 = vmatpush1.bf16.msra.mxu0 0
        %493 = vmatprep.subr.bf16.mxu0 0
        %494 = vmatpush1.bf16.msra.mxu0 0
        %495 = vmatprep.subr.bf16.mxu0 0
        %496 = vmatpush1.bf16.msra.mxu0 0
        %497 = vmatprep.subr.bf16.mxu0 0
        %498 = vmatpush1.bf16.msra.mxu0 0
        %499 = vmatprep.subr.bf16.mxu0 0
        %500 = vmatpush1.bf16.msra.mxu0 0
        %501 = vmatprep.subr.bf16.mxu0 0
        %502 = vmatpush1.bf16.msra.mxu0 0
        %503 = vmatprep.subr.bf16.mxu0 0
        %504 = vmatpush1.bf16.msra.mxu0 0
        %505 = vmatprep.subr.bf16.mxu0 0
        %506 = vmatpush1.bf16.msra.mxu0 0
        %507 = vmatprep.subr.bf16.mxu0 0
        %508 = vmatpush1.bf16.msra.mxu0 0
        %509 = vmatprep.subr.bf16.mxu0 0
        %510 = vmatpush1.bf16.msra.mxu0 0
        %511 = vmatprep.subr.bf16.mxu0 0
        %512 = vmatpush1.bf16.msra.mxu0 0
        %513 = vmatprep.subr.bf16.mxu0 0
        %514 = vmatpush1.bf16.msra.mxu0 0
        %515 = vmatprep.subr.bf16.mxu0 0
        %516 = vmatpush1.bf16.msra.mxu0 0
        %517 = vmatprep.mubr.bf16.mxu0 0
        %518 = vmatmul.mubr.bf16.gmra.mrb[0].mxu0 %v458
        %v519 = vpop.f32.mrb[0].mxu0
        %v520 = vadd.f32 %v454, %v519
        %v521 = vpop.f32.mrb[0].mxu0
        %v522 = vpop.f32.mrb[0].mxu0
        %v523 = vadd.f32 %v454, %v522
        %v524 = vpop.f32.mrb[0].mxu0
        %525 = vmatprep.mubr.bf16.mxu0 0
        %526 = vmatmul.mubr.bf16.gmra.mrb[0].mxu0 %v461
        %v527 = vpop.f32.mrb[0].mxu0
        %v528 = vadd.f32 %v454, %v527
        %v529 = vpop.f32.mrb[0].mxu0
        %v530 = vpop.f32.mrb[0].mxu0
        %v531 = vadd.f32 %v454, %v530
        %v532 = vpop.f32.mrb[0].mxu0
        %533 = vmatprep.mubr.bf16.mxu0 0
        %534 = vmatmul.mubr.bf16.gmra.mrb[0].mxu0 %v464
        %v535 = vpop.f32.mrb[0].mxu0
        %v536 = vadd.f32 %v454, %v535
        %v537 = vpop.f32.mrb[0].mxu0
        %v538 = vpop.f32.mrb[0].mxu0
        %v539 = vadd.f32 %v454, %v538
        %v540 = vpop.f32.mrb[0].mxu0
        %541 = vmatprep.mubr.bf16.mxu0 0
        %542 = vmatmul.mubr.bf16.gmra.mrb[0].mxu0 %v467
        %v543 = vpop.f32.mrb[0].mxu0
        %v544 = vadd.f32 %v454, %v543
        %v545 = vpop.f32.mrb[0].mxu0
        %v546 = vpop.f32.mrb[0].mxu0
        %v547 = vadd.f32 %v454, %v546
        %v548 = vpop.f32.mrb[0].mxu0
        %549 = vmatprep.mubr.bf16.mxu0 0
        %550 = vmatmul.mubr.bf16.gmra.mrb[0].mxu0 %v470
        %v551 = vpop.f32.mrb[0].mxu0
        %v552 = vadd.f32 %v454, %v551
        %v553 = vpop.f32.mrb[0].mxu0
        %v554 = vpop.f32.mrb[0].mxu0
        %v555 = vadd.f32 %v454, %v554
        %v556 = vpop.f32.mrb[0].mxu0
        %557 = vmatprep.mubr.bf16.mxu0 0
        %558 = vmatmul.mubr.bf16.gmra.mrb[0].mxu0 %v473
        %v559 = vpop.f32.mrb[0].mxu0
        %v560 = vadd.f32 %v454, %v559
        %v561 = vpop.f32.mrb[0].mxu0
        %v562 = vpop.f32.mrb[0].mxu0
        %v563 = vadd.f32 %v454, %v562
        %v564 = vpop.f32.mrb[0].mxu0
        %565 = vmatprep.mubr.bf16.mxu0 0
        %566 = vmatmul.mubr.bf16.gmra.mrb[0].mxu0 %v476
        %v567 = vpop.f32.mrb[0].mxu0
        %v568 = vadd.f32 %v454, %v567
        %v569 = vpop.f32.mrb[0].mxu0
        %v570 = vpop.f32.mrb[0].mxu0
        %v571 = vadd.f32 %v454, %v570
        %v572 = vpop.f32.mrb[0].mxu0
        %573 = vmatprep.mubr.bf16.mxu0 0
        %574 = vmatmul.mubr.bf16.gmra.mrb[0].mxu0 %v479
        %v575 = vpop.f32.mrb[0].mxu0
        %v576 = vadd.f32 %v454, %v575
        %v577 = vpop.f32.mrb[0].mxu0
        %v578 = vpop.f32.mrb[0].mxu0
        %v579 = vadd.f32 %v454, %v578
        %v580 = vpop.f32.mrb[0].mxu0
        %581 = vdwg.mxu0
        %vm582 = vcmp.gt.f32.partialorder %v520, 0.0
        %vm583 = vcmp.gt.f32.partialorder %v523, 0.0
        %vm584 = vcmp.gt.f32.partialorder %v528, 0.0
        %vm585 = vcmp.gt.f32.partialorder %v531, 0.0
        %vm586 = vcmp.gt.f32.partialorder %v536, 0.0
        %vm587 = vcmp.gt.f32.partialorder %v539, 0.0
        %vm588 = vcmp.gt.f32.partialorder %v544, 0.0
        %vm589 = vcmp.gt.f32.partialorder %v547, 0.0
        %vm590 = vcmp.gt.f32.partialorder %v552, 0.0
        %vm591 = vcmp.gt.f32.partialorder %v555, 0.0
        %vm592 = vcmp.gt.f32.partialorder %v560, 0.0
        %vm593 = vcmp.gt.f32.partialorder %v563, 0.0
        %vm594 = vcmp.gt.f32.partialorder %v568, 0.0
        %vm595 = vcmp.gt.f32.partialorder %v571, 0.0
        %vm596 = vcmp.gt.f32.partialorder %v576, 0.0
        %vm597 = vcmp.gt.f32.partialorder %v579, 0.0
        %v598 = vmul.f32 %v520, 0.1
        %v599 = vmul.f32 %v523, 0.1
        %v600 = vmul.f32 %v528, 0.1
        %v601 = vmul.f32 %v531, 0.1
        %v602 = vmul.f32 %v536, 0.1
        %v603 = vmul.f32 %v539, 0.1
        %v604 = vmul.f32 %v544, 0.1
        %v605 = vmul.f32 %v547, 0.1
        %v606 = vmul.f32 %v552, 0.1
        %v607 = vmul.f32 %v555, 0.1
        %v608 = vmul.f32 %v560, 0.1
        %v609 = vmul.f32 %v563, 0.1
        %v610 = vmul.f32 %v568, 0.1
        %v611 = vmul.f32 %v571, 0.1
        %v612 = vmul.f32 %v576, 0.1
        %v613 = vmul.f32 %v579, 0.1
        %v614 = vsel %vm582, %v520, %v598
        %v615 = vsel %vm583, %v523, %v599
        %v616 = vsel %vm584, %v528, %v600
        %v617 = vsel %vm585, %v531, %v601
        %v618 = vsel %vm586, %v536, %v602
        %v619 = vsel %vm587, %v539, %v603
        %v620 = vsel %vm588, %v544, %v604
        %v621 = vsel %vm589, %v547, %v605
        %v622 = vsel %vm590, %v552, %v606
        %v623 = vsel %vm591, %v555, %v607
        %v624 = vsel %vm592, %v560, %v608
        %v625 = vsel %vm593, %v563, %v609
        %v626 = vsel %vm594, %v568, %v610
        %v627 = vsel %vm595, %v571, %v611
        %v628 = vsel %vm596, %v576, %v612
        %v629 = vsel %vm597, %v579, %v613
        %s630 = smul.u32 %s21, 8
        %s631 = sadd.s32 %s630, 1
        %v632 = vpack.c.bf16 %v615, %v614
        %v633 = vpack.c.bf16 %v617, %v616
        %v634 = vpack.c.bf16 %v619, %v618
        %v635 = vpack.c.bf16 %v621, %v620
        %v636 = vpack.c.bf16 %v623, %v622
        %v637 = vpack.c.bf16 %v625, %v624
        %v638 = vpack.c.bf16 %v627, %v626
        %v639 = vpack.c.bf16 %v629, %v628
        %v648 = vunpack.c.l.b16 %v632
        %v649 = vunpack.c.h.b16 %v632
        %v650 = vunpack.c.l.b16 %v633
        %v651 = vunpack.c.h.b16 %v633
        %v652 = vunpack.c.l.b16 %v634
        %v653 = vunpack.c.h.b16 %v634
        %v654 = vunpack.c.l.b16 %v635
        %v655 = vunpack.c.h.b16 %v635
        %v656 = vunpack.c.l.b16 %v636
        %v657 = vunpack.c.h.b16 %v636
        %v658 = vunpack.c.l.b16 %v637
        %v659 = vunpack.c.h.b16 %v637
        %v660 = vunpack.c.l.b16 %v638
        %v661 = vunpack.c.h.b16 %v638
        %v662 = vunpack.c.l.b16 %v639
        %v663 = vunpack.c.h.b16 %v639
        %v664 = vpack.c.b16 %v648, %v648
        %v665 = vpack.c.b16 %v649, %v649
        %v666 = vpack.c.b16 %v650, %v650
        %v667 = vpack.c.b16 %v651, %v651
        %v668 = vpack.c.b16 %v652, %v652
        %v669 = vpack.c.b16 %v653, %v653
        %v670 = vpack.c.b16 %v654, %v654
        %v671 = vpack.c.b16 %v655, %v655
        %v672 = vpack.c.b16 %v656, %v656
        %v673 = vpack.c.b16 %v657, %v657
        %v674 = vpack.c.b16 %v658, %v658
        %v675 = vpack.c.b16 %v659, %v659
        %v676 = vpack.c.b16 %v660, %v660
        %v677 = vpack.c.b16 %v661, %v661
        %v678 = vpack.c.b16 %v662, %v662
        %v679 = vpack.c.b16 %v663, %v663
        %vm680 = vsmask.f32 256
        %vm681 = vsmask.f32 4368
        %vm682 = vmor %vm680, %vm681
        %v684 = vshrl.u32 %v664, 16
        %v686 = vrot.slane %v684, 7
        %v687 = vshll.u32 %v664, 16
        %v689 = vor.u32 %v686, %v687
        %v690 = vrot.slane %v686, 4
        %v692 = vshrl.u32 %v665, 16
        %v694 = vrot.slane %v692, 7
        %v695 = vshll.u32 %v665, 16
        %v697 = vor.u32 %v694, %v695
        %v698 = vsel %vm682, %v690, %v697
        %v699 = vrot.slane %v694, 4
        %v701 = vshrl.u32 %v666, 16
        %v703 = vrot.slane %v701, 7
        %v704 = vshll.u32 %v666, 16
        %v706 = vor.u32 %v703, %v704
        %v707 = vrot.slane %v703, 4
        %v709 = vshrl.u32 %v667, 16
        %v711 = vrot.slane %v709, 7
        %v712 = vshll.u32 %v667, 16
        %v714 = vor.u32 %v711, %v712
        %v715 = vsel %vm682, %v707, %v714
        %v716 = vrot.slane %v711, 4
        %v718 = vshrl.u32 %v668, 16
        %v720 = vrot.slane %v718, 7
        %v721 = vshll.u32 %v668, 16
        %v723 = vor.u32 %v720, %v721
        %v724 = vrot.slane %v720, 4
        %v726 = vshrl.u32 %v669, 16
        %v728 = vrot.slane %v726, 7
        %v729 = vshll.u32 %v669, 16
        %v731 = vor.u32 %v728, %v729
        %v732 = vsel %vm682, %v724, %v731
        %v733 = vrot.slane %v728, 4
        %v735 = vshrl.u32 %v670, 16
        %v737 = vrot.slane %v735, 7
        %v738 = vshll.u32 %v670, 16
        %v740 = vor.u32 %v737, %v738
        %v741 = vrot.slane %v737, 4
        %v743 = vshrl.u32 %v671, 16
        %v745 = vrot.slane %v743, 7
        %v746 = vshll.u32 %v671, 16
        %v748 = vor.u32 %v745, %v746
        %v749 = vsel %vm682, %v741, %v748
        %v750 = vrot.slane %v745, 4
        %v752 = vshrl.u32 %v672, 16
        %v754 = vrot.slane %v752, 7
        %v755 = vshll.u32 %v672, 16
        %v757 = vor.u32 %v754, %v755
        %v758 = vrot.slane %v754, 4
        %v760 = vshrl.u32 %v673, 16
        %v762 = vrot.slane %v760, 7
        %v763 = vshll.u32 %v673, 16
        %v765 = vor.u32 %v762, %v763
        %v766 = vsel %vm682, %v758, %v765
        %v767 = vrot.slane %v762, 4
        %v769 = vshrl.u32 %v674, 16
        %v771 = vrot.slane %v769, 7
        %v772 = vshll.u32 %v674, 16
        %v774 = vor.u32 %v771, %v772
        %v775 = vrot.slane %v771, 4
        %v777 = vshrl.u32 %v675, 16
        %v779 = vrot.slane %v777, 7
        %v780 = vshll.u32 %v675, 16
        %v782 = vor.u32 %v779, %v780
        %v783 = vsel %vm682, %v775, %v782
        %v784 = vrot.slane %v779, 4
        %v786 = vshrl.u32 %v676, 16
        %v788 = vrot.slane %v786, 7
        %v789 = vshll.u32 %v676, 16
        %v791 = vor.u32 %v788, %v789
        %v792 = vrot.slane %v788, 4
        %v794 = vshrl.u32 %v677, 16
        %v796 = vrot.slane %v794, 7
        %v797 = vshll.u32 %v677, 16
        %v799 = vor.u32 %v796, %v797
        %v800 = vsel %vm682, %v792, %v799
        %v801 = vrot.slane %v796, 4
        %v803 = vshrl.u32 %v678, 16
        %v805 = vrot.slane %v803, 7
        %v806 = vshll.u32 %v678, 16
        %v808 = vor.u32 %v805, %v806
        %v809 = vrot.slane %v805, 4
        %v811 = vshrl.u32 %v679, 16
        %v813 = vrot.slane %v811, 7
        %v814 = vshll.u32 %v679, 16
        %v816 = vor.u32 %v813, %v814
        %v817 = vsel %vm682, %v809, %v816
        %v818 = vrot.slane %v813, 4
        %s843 = smul.u32 %s631, 3
        %s844 = smul.addr %s843, 4
        %s845 = scalar_lea.vmem [#allocation2], %s844
        %vm846 = vcmask 27648
        %vm847 = vsmask.f32 7938
        %vm848 = vmand %vm846, %vm847
        %v849 = vld [vmem:[%s845] sm:$0xf]
        %v850 = vsel %vm848, %v689, %v849
        %851 = vst [vmem:[%s845] sm:$0xf] %v850
        %vm852 = vcmask 27648
        %853 = vst.msk [vmem:[%s845 + $0x4] sm:$0xf] %vm852, %v698
        %vm854 = vcmask 24576
        %vm855 = vmand %vm854, %vm680
        %v856 = vld [vmem:[%s845 + $0x8] sm:$0x1]
        %v857 = vsel %vm855, %v699, %v856
        %858 = vst [vmem:[%s845 + $0x8] sm:$0x1] %v857
        %v859 = vld [vmem:[%s845 + $0xc] sm:$0xf]
        %v860 = vsel %vm848, %v706, %v859
        %861 = vst [vmem:[%s845 + $0xc] sm:$0xf] %v860
        %862 = vst.msk [vmem:[%s845 + $0x10] sm:$0xf] %vm852, %v715
        %v863 = vld [vmem:[%s845 + $0x14] sm:$0x1]
        %v864 = vsel %vm855, %v716, %v863
        %865 = vst [vmem:[%s845 + $0x14] sm:$0x1] %v864
        %v866 = vld [vmem:[%s845 + $0x18] sm:$0xf]
        %v867 = vsel %vm848, %v723, %v866
        %868 = vst [vmem:[%s845 + $0x18] sm:$0xf] %v867
        %869 = vst.msk [vmem:[%s845 + $0x1c] sm:$0xf] %vm852, %v732
        %v870 = vld [vmem:[%s845 + $0x20] sm:$0x1]
        %v871 = vsel %vm855, %v733, %v870
        %872 = vst [vmem:[%s845 + $0x20] sm:$0x1] %v871
        %v873 = vld [vmem:[%s845 + $0x24] sm:$0xf]
        %v874 = vsel %vm848, %v740, %v873
        %875 = vst [vmem:[%s845 + $0x24] sm:$0xf] %v874
        %876 = vst.msk [vmem:[%s845 + $0x28] sm:$0xf] %vm852, %v749
        %v877 = vld [vmem:[%s845 + $0x2c] sm:$0x1]
        %v878 = vsel %vm855, %v750, %v877
        %879 = vst [vmem:[%s845 + $0x2c] sm:$0x1] %v878
        %v880 = vld [vmem:[%s845 + $0x30] sm:$0xf]
        %v881 = vsel %vm848, %v757, %v880
        %882 = vst [vmem:[%s845 + $0x30] sm:$0xf] %v881
        %883 = vst.msk [vmem:[%s845 + $0x34] sm:$0xf] %vm852, %v766
        %v884 = vld [vmem:[%s845 + $0x38] sm:$0x1]
        %v885 = vsel %vm855, %v767, %v884
        %886 = vst [vmem:[%s845 + $0x38] sm:$0x1] %v885
        %v887 = vld [vmem:[%s845 + $0x3c] sm:$0xf]
        %v888 = vsel %vm848, %v774, %v887
        %889 = vst [vmem:[%s845 + $0x3c] sm:$0xf] %v888
        %890 = vst.msk [vmem:[%s845 + $0x40] sm:$0xf] %vm852, %v783
        %v891 = vld [vmem:[%s845 + $0x44] sm:$0x1]
        %v892 = vsel %vm855, %v784, %v891
        %893 = vst [vmem:[%s845 + $0x44] sm:$0x1] %v892
        %v894 = vld [vmem:[%s845 + $0x48] sm:$0xf]
        %v895 = vsel %vm848, %v791, %v894
        %896 = vst [vmem:[%s845 + $0x48] sm:$0xf] %v895
        %897 = vst.msk [vmem:[%s845 + $0x4c] sm:$0xf] %vm852, %v800
        %v898 = vld [vmem:[%s845 + $0x50] sm:$0x1]
        %v899 = vsel %vm855, %v801, %v898
        %900 = vst [vmem:[%s845 + $0x50] sm:$0x1] %v899
        %v901 = vld [vmem:[%s845 + $0x54] sm:$0xf]
        %v902 = vsel %vm848, %v808, %v901
        %903 = vst [vmem:[%s845 + $0x54] sm:$0xf] %v902
        %904 = vst.msk [vmem:[%s845 + $0x58] sm:$0xf] %vm852, %v817
        %v905 = vld [vmem:[%s845 + $0x5c] sm:$0x1]
        %v906 = vsel %vm855, %v818, %v905
        %907 = vst [vmem:[%s845 + $0x5c] sm:$0x1] %v906
      $region48: #{tpu_custom_call.1} parent=39 // pred_fallthru
        _
      %p908 = scmp.ge.s32.totalorder %s21, 1
      // Predicated region
      $region49: #{tpu_custom_call.1} parent=39 // pred_check
        %p909 = pneg %p908
      $region50: #{tpu_custom_call.1} parent=39 // pred_check_branch
        %911 = sbr.rel (%p909) target = $region52
      $region51: #{tpu_custom_call.1} parent=39 // pred_region
        %s912 = ssub.s32 %s21, 1
        %s913 = smul.u32 %s912, 8
        %s914 = smul.u32 %s913, 3
        %s915 = smul.addr %s914, 4
        %s916 = scalar_lea.vmem [#allocation2], %s915
        %v917 = vld [vmem:[%s916] sm:$0xf]
        %v918 = vld [vmem:[%s916 + $0x4] sm:$0xf]
        %v919 = vld [vmem:[%s916 + $0xc] sm:$0xf]
        %v920 = vld [vmem:[%s916 + $0x10] sm:$0xf]
        %v921 = vld [vmem:[%s916 + $0x18] sm:$0xf]
        %v922 = vld [vmem:[%s916 + $0x1c] sm:$0xf]
        %v923 = vld [vmem:[%s916 + $0x24] sm:$0xf]
        %v924 = vld [vmem:[%s916 + $0x28] sm:$0xf]
        %v925 = vld [vmem:[%s916 + $0x30] sm:$0xf]
        %v926 = vld [vmem:[%s916 + $0x34] sm:$0xf]
        %v927 = vld [vmem:[%s916 + $0x3c] sm:$0xf]
        %v928 = vld [vmem:[%s916 + $0x40] sm:$0xf]
        %v929 = vld [vmem:[%s916 + $0x48] sm:$0xf]
        %v930 = vld [vmem:[%s916 + $0x4c] sm:$0xf]
        %v931 = vld [vmem:[%s916 + $0x54] sm:$0xf]
        %v932 = vld [vmem:[%s916 + $0x58] sm:$0xf]
        %v933 = vld [vmem:[%s916 + $0x60] sm:$0xf]
        %v934 = vld [vmem:[%s916 + $0x64] sm:$0xf]
        %v935 = vld [vmem:[%s916 + $0x6c] sm:$0xf]
        %v936 = vld [vmem:[%s916 + $0x70] sm:$0xf]
        %v953 = vunpack.c.l.b16 %v917
        %v954 = vunpack.c.l.b16 %v918
        %v955 = vunpack.c.l.b16 %v919
        %v956 = vunpack.c.l.b16 %v920
        %v957 = vunpack.c.l.b16 %v921
        %v958 = vunpack.c.l.b16 %v922
        %v959 = vunpack.c.l.b16 %v923
        %v960 = vunpack.c.l.b16 %v924
        %v961 = vunpack.c.l.b16 %v925
        %v962 = vunpack.c.l.b16 %v926
        %v963 = vunpack.c.l.b16 %v927
        %v964 = vunpack.c.l.b16 %v928
        %v965 = vunpack.c.l.b16 %v929
        %v966 = vunpack.c.l.b16 %v930
        %v967 = vunpack.c.l.b16 %v931
        %v968 = vunpack.c.l.b16 %v932
        %v969 = vpack.c.b16 %v954, %v953
        %v970 = vpack.c.b16 %v956, %v955
        %v971 = vpack.c.b16 %v958, %v957
        %v972 = vpack.c.b16 %v960, %v959
        %v973 = vpack.c.b16 %v962, %v961
        %v974 = vpack.c.b16 %v964, %v963
        %v975 = vpack.c.b16 %v966, %v965
        %v976 = vpack.c.b16 %v968, %v967
        %v979 = vunpack.c.l.b16 %v933
        %v980 = vunpack.c.l.b16 %v934
        %v981 = vpack.c.b16 %v980, %v979
        %982 = vrot.lane.b32.xlu0 %v970, 4
        %v983 = vpop.permute.xlu0 %982
        %984 = vrot.lane.b32.xlu0 %v971, 4
        %v985 = vpop.permute.xlu0 %984
        %986 = vrot.lane.b32.xlu0 %v972, 4
        %v987 = vpop.permute.xlu0 %986
        %988 = vrot.lane.b32.xlu0 %v973, 4
        %v989 = vpop.permute.xlu0 %988
        %990 = vrot.lane.b32.xlu0 %v974, 4
        %v991 = vpop.permute.xlu0 %990
        %992 = vrot.lane.b32.xlu0 %v975, 4
        %v993 = vpop.permute.xlu0 %992
        %994 = vrot.lane.b32.xlu0 %v976, 4
        %v995 = vpop.permute.xlu0 %994
        %996 = vrot.lane.b32.xlu0 %v981, 4
        %v997 = vpop.permute.xlu0 %996
        %v1000 = vunpack.c.l.b16 %v935
        %v1001 = vunpack.c.l.b16 %v936
        %v1002 = vpack.c.b16 %v1001, %v1000
        %1003 = vrot.lane.b32.xlu0 %v971, 8
        %v1004 = vpop.permute.xlu0 %1003
        %1005 = vrot.lane.b32.xlu0 %v972, 8
        %v1006 = vpop.permute.xlu0 %1005
        %1007 = vrot.lane.b32.xlu0 %v973, 8
        %v1008 = vpop.permute.xlu0 %1007
        %1009 = vrot.lane.b32.xlu0 %v974, 8
        %v1010 = vpop.permute.xlu0 %1009
        %1011 = vrot.lane.b32.xlu0 %v975, 8
        %v1012 = vpop.permute.xlu0 %1011
        %1013 = vrot.lane.b32.xlu0 %v976, 8
        %v1014 = vpop.permute.xlu0 %1013
        %1015 = vrot.lane.b32.xlu0 %v981, 8
        %v1016 = vpop.permute.xlu0 %1015
        %1017 = vrot.lane.b32.xlu0 %v1002, 8
        %v1018 = vpop.permute.xlu0 %1017
        %vm1019 = vcmask 31744
        %v1022 = vsel %vm1019, %v969, %v983
        %v1025 = vsel %vm1019, %v970, %v985
        %v1028 = vsel %vm1019, %v971, %v987
        %v1031 = vsel %vm1019, %v972, %v989
        %v1034 = vsel %vm1019, %v973, %v991
        %v1037 = vsel %vm1019, %v974, %v993
        %v1040 = vsel %vm1019, %v975, %v995
        %v1043 = vsel %vm1019, %v976, %v997
        %vm1044 = vcmask 64512
        %v1046 = vsel %vm1044, %v1022, %v1004
        %v1048 = vsel %vm1044, %v1025, %v1006
        %v1050 = vsel %vm1044, %v1028, %v1008
        %v1052 = vsel %vm1044, %v1031, %v1010
        %v1054 = vsel %vm1044, %v1034, %v1012
        %v1056 = vsel %vm1044, %v1037, %v1014
        %v1058 = vsel %vm1044, %v1040, %v1016
        %v1060 = vsel %vm1044, %v1043, %v1018
        %v1061 = vld [vmem:[%s3] sm:$0xf]
        %v1062 = vld [vmem:[%s3 + $0x4] sm:$0x3]
        %v1063 = vld [vmem:[%s916 + $0x8] sm:$0x1]
        %v1064 = vld [vmem:[%s916 + $0x14] sm:$0x1]
        %v1065 = vld [vmem:[%s916 + $0x20] sm:$0x1]
        %v1066 = vld [vmem:[%s916 + $0x2c] sm:$0x1]
        %v1067 = vld [vmem:[%s916 + $0x38] sm:$0x1]
        %v1068 = vld [vmem:[%s916 + $0x44] sm:$0x1]
        %v1069 = vld [vmem:[%s916 + $0x50] sm:$0x1]
        %v1070 = vld [vmem:[%s916 + $0x5c] sm:$0x1]
        %v1071 = vld [vmem:[%s916 + $0x68] sm:$0x1]
        %v1072 = vld [vmem:[%s916 + $0x74] sm:$0x1]
        %v1081 = vunpack.c.l.b16 %v1063
        %v1082 = vunpack.c.l.b16 %v1064
        %v1083 = vunpack.c.l.b16 %v1065
        %v1084 = vunpack.c.l.b16 %v1066
        %v1085 = vunpack.c.l.b16 %v1067
        %v1086 = vunpack.c.l.b16 %v1068
        %v1087 = vunpack.c.l.b16 %v1069
        %v1088 = vunpack.c.l.b16 %v1070
        %v1089 = vpack.c.b16 %v1081, %v1081
        %v1090 = vpack.c.b16 %v1082, %v1082
        %v1091 = vpack.c.b16 %v1083, %v1083
        %v1092 = vpack.c.b16 %v1084, %v1084
        %v1093 = vpack.c.b16 %v1085, %v1085
        %v1094 = vpack.c.b16 %v1086, %v1086
        %v1095 = vpack.c.b16 %v1087, %v1087
        %v1096 = vpack.c.b16 %v1088, %v1088
        %v1098 = vunpack.c.l.b16 %v1071
        %v1099 = vpack.c.b16 %v1098, %v1098
        %1100 = vrot.lane.b32.xlu0 %v1090, 4
        %v1101 = vpop.permute.xlu0 %1100
        %1102 = vrot.lane.b32.xlu0 %v1091, 4
        %v1103 = vpop.permute.xlu0 %1102
        %1104 = vrot.lane.b32.xlu0 %v1092, 4
        %v1105 = vpop.permute.xlu0 %1104
        %1106 = vrot.lane.b32.xlu0 %v1093, 4
        %v1107 = vpop.permute.xlu0 %1106
        %1108 = vrot.lane.b32.xlu0 %v1094, 4
        %v1109 = vpop.permute.xlu0 %1108
        %1110 = vrot.lane.b32.xlu0 %v1095, 4
        %v1111 = vpop.permute.xlu0 %1110
        %1112 = vrot.lane.b32.xlu0 %v1096, 4
        %v1113 = vpop.permute.xlu0 %1112
        %1114 = vrot.lane.b32.xlu0 %v1099, 4
        %v1115 = vpop.permute.xlu0 %1114
        %v1117 = vunpack.c.l.b16 %v1072
        %v1118 = vpack.c.b16 %v1117, %v1117
        %1119 = vrot.lane.b32.xlu0 %v1091, 8
        %v1120 = vpop.permute.xlu0 %1119
        %1121 = vrot.lane.b32.xlu0 %v1092, 8
        %v1122 = vpop.permute.xlu0 %1121
        %1123 = vrot.lane.b32.xlu0 %v1093, 8
        %v1124 = vpop.permute.xlu0 %1123
        %1125 = vrot.lane.b32.xlu0 %v1094, 8
        %v1126 = vpop.permute.xlu0 %1125
        %1127 = vrot.lane.b32.xlu0 %v1095, 8
        %v1128 = vpop.permute.xlu0 %1127
        %1129 = vrot.lane.b32.xlu0 %v1096, 8
        %v1130 = vpop.permute.xlu0 %1129
        %1131 = vrot.lane.b32.xlu0 %v1099, 8
        %v1132 = vpop.permute.xlu0 %1131
        %1133 = vrot.lane.b32.xlu0 %v1118, 8
        %v1134 = vpop.permute.xlu0 %1133
        %v1137 = vsel %vm1019, %v1089, %v1101
        %v1140 = vsel %vm1019, %v1090, %v1103
        %v1143 = vsel %vm1019, %v1091, %v1105
        %v1146 = vsel %vm1019, %v1092, %v1107
        %v1149 = vsel %vm1019, %v1093, %v1109
        %v1152 = vsel %vm1019, %v1094, %v1111
        %v1155 = vsel %vm1019, %v1095, %v1113
        %v1158 = vsel %vm1019, %v1096, %v1115
        %v1160 = vsel %vm1044, %v1137, %v1120
        %v1162 = vsel %vm1044, %v1140, %v1122
        %v1164 = vsel %vm1044, %v1143, %v1124
        %v1166 = vsel %vm1044, %v1146, %v1126
        %v1168 = vsel %vm1044, %v1149, %v1128
        %v1170 = vsel %vm1044, %v1152, %v1130
        %v1172 = vsel %vm1044, %v1155, %v1132
        %v1174 = vsel %vm1044, %v1158, %v1134
        %vm1175 = vsmask.f32 7424
        %v1176 = vshrl.u32 %v1046, 16
        %v1178 = vshll.u32 %v1046, 16
        %v1180 = vrot.slane %v1178, 1
        %v1181 = vor.u32 %v1176, %v1180
        %v1182 = vshll.u32 %v1160, 16
        %v1184 = vrot.slane %v1182, 1
        %v1185 = vsel %vm1175, %v1181, %v1184
        %v1186 = vshrl.u32 %v1048, 16
        %v1188 = vshll.u32 %v1048, 16
        %v1190 = vrot.slane %v1188, 1
        %v1191 = vor.u32 %v1186, %v1190
        %v1192 = vshll.u32 %v1162, 16
        %v1194 = vrot.slane %v1192, 1
        %v1195 = vsel %vm1175, %v1191, %v1194
        %v1196 = vshrl.u32 %v1050, 16
        %v1198 = vshll.u32 %v1050, 16
        %v1200 = vrot.slane %v1198, 1
        %v1201 = vor.u32 %v1196, %v1200
        %v1202 = vshll.u32 %v1164, 16
        %v1204 = vrot.slane %v1202, 1
        %v1205 = vsel %vm1175, %v1201, %v1204
        %v1206 = vshrl.u32 %v1052, 16
        %v1208 = vshll.u32 %v1052, 16
        %v1210 = vrot.slane %v1208, 1
        %v1211 = vor.u32 %v1206, %v1210
        %v1212 = vshll.u32 %v1166, 16
        %v1214 = vrot.slane %v1212, 1
        %v1215 = vsel %vm1175, %v1211, %v1214
        %v1216 = vshrl.u32 %v1054, 16
        %v1218 = vshll.u32 %v1054, 16
        %v1220 = vrot.slane %v1218, 1
        %v1221 = vor.u32 %v1216, %v1220
        %v1222 = vshll.u32 %v1168, 16
        %v1224 = vrot.slane %v1222, 1
        %v1225 = vsel %vm1175, %v1221, %v1224
        %v1226 = vshrl.u32 %v1056, 16
        %v1228 = vshll.u32 %v1056, 16
        %v1230 = vrot.slane %v1228, 1
        %v1231 = vor.u32 %v1226, %v1230
        %v1232 = vshll.u32 %v1170, 16
        %v1234 = vrot.slane %v1232, 1
        %v1235 = vsel %vm1175, %v1231, %v1234
        %v1236 = vshrl.u32 %v1058, 16
        %v1238 = vshll.u32 %v1058, 16
        %v1240 = vrot.slane %v1238, 1
        %v1241 = vor.u32 %v1236, %v1240
        %v1242 = vshll.u32 %v1172, 16
        %v1244 = vrot.slane %v1242, 1
        %v1245 = vsel %vm1175, %v1241, %v1244
        %v1246 = vshrl.u32 %v1060, 16
        %v1248 = vshll.u32 %v1060, 16
        %v1250 = vrot.slane %v1248, 1
        %v1251 = vor.u32 %v1246, %v1250
        %v1252 = vshll.u32 %v1174, 16
        %v1254 = vrot.slane %v1252, 1
        %v1255 = vsel %vm1175, %v1251, %v1254
        %s1256 = scalar_lea.vmem %s3, 8
        %v1257 = vld [vmem:[%s1256] sm:$0xf]
        %v1258 = vld [vmem:[%s1256 + $0x4] sm:$0x3]
        %v1261 = vunpack.c.l.b16 %v1257
        %v1262 = vunpack.c.l.b16 %v1258
        %v1263 = vpack.c.b16 %v1262, %v1261
        %vm1264 = vcmask 97280
        %v1266 = vsel %vm1264, %v1185, 0
        %v1269 = vsel %vm1264, %v1195, 0
        %v1272 = vsel %vm1264, %v1205, 0
        %v1275 = vsel %vm1264, %v1215, 0
        %v1278 = vsel %vm1264, %v1225, 0
        %v1281 = vsel %vm1264, %v1235, 0
        %v1284 = vsel %vm1264, %v1245, 0
        %v1287 = vsel %vm1264, %v1255, 0
        %vm1289 = vcmask 1045504
        %v1291 = vsel %vm1289, %v1263, 0
        %1293 = vmatprep.subr.bf16.mxu0 0
        %1294 = vmatpush1.bf16.msra.mxu0 %v1291
        %1295 = vmatprep.subr.bf16.mxu0 0
        %1296 = vmatpush1.bf16.msra.mxu0 0
        %1297 = vmatprep.subr.bf16.mxu0 0
        %1298 = vmatpush1.bf16.msra.mxu0 0
        %1299 = vmatprep.subr.bf16.mxu0 0
        %1300 = vmatpush1.bf16.msra.mxu0 0
        %1301 = vmatprep.subr.bf16.mxu0 0
        %1302 = vmatpush1.bf16.msra.mxu0 0
        %1303 = vmatprep.subr.bf16.mxu0 0
        %1304 = vmatpush1.bf16.msra.mxu0 0
        %1305 = vmatprep.subr.bf16.mxu0 0
        %1306 = vmatpush1.bf16.msra.mxu0 0
        %1307 = vmatprep.subr.bf16.mxu0 0
        %1308 = vmatpush1.bf16.msra.mxu0 0
        %1309 = vmatprep.subr.bf16.mxu0 0
        %1310 = vmatpush1.bf16.msra.mxu0 0
        %1311 = vmatprep.subr.bf16.mxu0 0
        %1312 = vmatpush1.bf16.msra.mxu0 0
        %1313 = vmatprep.subr.bf16.mxu0 0
        %1314 = vmatpush1.bf16.msra.mxu0 0
        %1315 = vmatprep.subr.bf16.mxu0 0
        %1316 = vmatpush1.bf16.msra.mxu0 0
        %1317 = vmatprep.subr.bf16.mxu0 0
        %1318 = vmatpush1.bf16.msra.mxu0 0
        %1319 = vmatprep.subr.bf16.mxu0 0
        %1320 = vmatpush1.bf16.msra.mxu0 0
        %1321 = vmatprep.subr.bf16.mxu0 0
        %1322 = vmatpush1.bf16.msra.mxu0 0
        %1323 = vmatprep.subr.bf16.mxu0 0
        %1324 = vmatpush1.bf16.msra.mxu0 0
        %1325 = vmatprep.mubr.bf16.mxu0 0
        %1326 = vmatmul.mubr.bf16.gmra.mrb[0].mxu0 %v1266
        %v1327 = vpop.f32.mrb[0].mxu0
        %v1328 = vadd.f32 0.0, %v1327
        %v1329 = vpop.f32.mrb[0].mxu0
        %v1330 = vpop.f32.mrb[0].mxu0
        %v1331 = vadd.f32 0.0, %v1330
        %v1332 = vpop.f32.mrb[0].mxu0
        %1333 = vmatprep.mubr.bf16.mxu0 0
        %1334 = vmatmul.mubr.bf16.gmra.mrb[0].mxu0 %v1269
        %v1335 = vpop.f32.mrb[0].mxu0
        %v1336 = vadd.f32 0.0, %v1335
        %v1337 = vpop.f32.mrb[0].mxu0
        %v1338 = vpop.f32.mrb[0].mxu0
        %v1339 = vadd.f32 0.0, %v1338
        %v1340 = vpop.f32.mrb[0].mxu0
        %1341 = vmatprep.mubr.bf16.mxu0 0
        %1342 = vmatmul.mubr.bf16.gmra.mrb[0].mxu0 %v1272
        %v1343 = vpop.f32.mrb[0].mxu0
        %v1344 = vadd.f32 0.0, %v1343
        %v1345 = vpop.f32.mrb[0].mxu0
        %v1346 = vpop.f32.mrb[0].mxu0
        %v1347 = vadd.f32 0.0, %v1346
        %v1348 = vpop.f32.mrb[0].mxu0
        %1349 = vmatprep.mubr.bf16.mxu0 0
        %1350 = vmatmul.mubr.bf16.gmra.mrb[0].mxu0 %v1275
        %v1351 = vpop.f32.mrb[0].mxu0
        %v1352 = vadd.f32 0.0, %v1351
        %v1353 = vpop.f32.mrb[0].mxu0
        %v1354 = vpop.f32.mrb[0].mxu0
        %v1355 = vadd.f32 0.0, %v1354
        %v1356 = vpop.f32.mrb[0].mxu0
        %1357 = vmatprep.mubr.bf16.mxu0 0
        %1358 = vmatmul.mubr.bf16.gmra.mrb[0].mxu0 %v1278
        %v1359 = vpop.f32.mrb[0].mxu0
        %v1360 = vadd.f32 0.0, %v1359
        %v1361 = vpop.f32.mrb[0].mxu0
        %v1362 = vpop.f32.mrb[0].mxu0
        %v1363 = vadd.f32 0.0, %v1362
        %v1364 = vpop.f32.mrb[0].mxu0
        %1365 = vmatprep.mubr.bf16.mxu0 0
        %1366 = vmatmul.mubr.bf16.gmra.mrb[0].mxu0 %v1281
        %v1367 = vpop.f32.mrb[0].mxu0
        %v1368 = vadd.f32 0.0, %v1367
        %v1369 = vpop.f32.mrb[0].mxu0
        %v1370 = vpop.f32.mrb[0].mxu0
        %v1371 = vadd.f32 0.0, %v1370
        %v1372 = vpop.f32.mrb[0].mxu0
        %1373 = vmatprep.mubr.bf16.mxu0 0
        %1374 = vmatmul.mubr.bf16.gmra.mrb[0].mxu0 %v1284
        %v1375 = vpop.f32.mrb[0].mxu0
        %v1376 = vadd.f32 0.0, %v1375
        %v1377 = vpop.f32.mrb[0].mxu0
        %v1378 = vpop.f32.mrb[0].mxu0
        %v1379 = vadd.f32 0.0, %v1378
        %v1380 = vpop.f32.mrb[0].mxu0
        %1381 = vmatprep.mubr.bf16.mxu0 0
        %1382 = vmatmul.mubr.bf16.gmra.mrb[0].mxu0 %v1287
        %v1383 = vpop.f32.mrb[0].mxu0
        %v1384 = vadd.f32 0.0, %v1383
        %v1385 = vpop.f32.mrb[0].mxu0
        %v1386 = vpop.f32.mrb[0].mxu0
        %v1387 = vadd.f32 0.0, %v1386
        %v1388 = vpop.f32.mrb[0].mxu0
        %1389 = vdwg.mxu0
        %v1392 = vunpack.c.l.b16 %v1061
        %v1393 = vunpack.c.l.b16 %v1062
        %v1394 = vpack.c.b16 %v1393, %v1392
        %v1395 = vsel %vm1264, %v1046, 0
        %v1397 = vsel %vm1264, %v1048, 0
        %v1399 = vsel %vm1264, %v1050, 0
        %v1401 = vsel %vm1264, %v1052, 0
        %v1403 = vsel %vm1264, %v1054, 0
        %v1405 = vsel %vm1264, %v1056, 0
        %v1407 = vsel %vm1264, %v1058, 0
        %v1409 = vsel %vm1264, %v1060, 0
        %v1412 = vsel %vm1289, %v1394, 0
        %1414 = vmatprep.subr.bf16.mxu0 0
        %1415 = vmatpush1.bf16.msra.mxu0 %v1412
        %1416 = vmatprep.subr.bf16.mxu0 0
        %1417 = vmatpush1.bf16.msra.mxu0 0
        %1418 = vmatprep.subr.bf16.mxu0 0
        %1419 = vmatpush1.bf16.msra.mxu0 0
        %1420 = vmatprep.subr.bf16.mxu0 0
        %1421 = vmatpush1.bf16.msra.mxu0 0
        %1422 = vmatprep.subr.bf16.mxu0 0
        %1423 = vmatpush1.bf16.msra.mxu0 0
        %1424 = vmatprep.subr.bf16.mxu0 0
        %1425 = vmatpush1.bf16.msra.mxu0 0
        %1426 = vmatprep.subr.bf16.mxu0 0
        %1427 = vmatpush1.bf16.msra.mxu0 0
        %1428 = vmatprep.subr.bf16.mxu0 0
        %1429 = vmatpush1.bf16.msra.mxu0 0
        %1430 = vmatprep.subr.bf16.mxu0 0
        %1431 = vmatpush1.bf16.msra.mxu0 0
        %1432 = vmatprep.subr.bf16.mxu0 0
        %1433 = vmatpush1.bf16.msra.mxu0 0
        %1434 = vmatprep.subr.bf16.mxu0 0
        %1435 = vmatpush1.bf16.msra.mxu0 0
        %1436 = vmatprep.subr.bf16.mxu0 0
        %1437 = vmatpush1.bf16.msra.mxu0 0
        %1438 = vmatprep.subr.bf16.mxu0 0
        %1439 = vmatpush1.bf16.msra.mxu0 0
        %1440 = vmatprep.subr.bf16.mxu0 0
        %1441 = vmatpush1.bf16.msra.mxu0 0
        %1442 = vmatprep.subr.bf16.mxu0 0
        %1443 = vmatpush1.bf16.msra.mxu0 0
        %1444 = vmatprep.subr.bf16.mxu0 0
        %1445 = vmatpush1.bf16.msra.mxu0 0
        %1446 = vmatprep.mubr.bf16.mxu0 0
        %1447 = vmatmul.mubr.bf16.gmra.mrb[0].mxu0 %v1395
        %v1448 = vpop.f32.mrb[0].mxu0
        %v1449 = vadd.f32 %v1328, %v1448
        %v1450 = vpop.f32.mrb[0].mxu0
        %v1451 = vpop.f32.mrb[0].mxu0
        %v1452 = vadd.f32 %v1331, %v1451
        %v1453 = vpop.f32.mrb[0].mxu0
        %1454 = vmatprep.mubr.bf16.mxu0 0
        %1455 = vmatmul.mubr.bf16.gmra.mrb[0].mxu0 %v1397
        %v1456 = vpop.f32.mrb[0].mxu0
        %v1457 = vadd.f32 %v1336, %v1456
        %v1458 = vpop.f32.mrb[0].mxu0
        %v1459 = vpop.f32.mrb[0].mxu0
        %v1460 = vadd.f32 %v1339, %v1459
        %v1461 = vpop.f32.mrb[0].mxu0
        %1462 = vmatprep.mubr.bf16.mxu0 0
        %1463 = vmatmul.mubr.bf16.gmra.mrb[0].mxu0 %v1399
        %v1464 = vpop.f32.mrb[0].mxu0
        %v1465 = vadd.f32 %v1344, %v1464
        %v1466 = vpop.f32.mrb[0].mxu0
        %v1467 = vpop.f32.mrb[0].mxu0
        %v1468 = vadd.f32 %v1347, %v1467
        %v1469 = vpop.f32.mrb[0].mxu0
        %1470 = vmatprep.mubr.bf16.mxu0 0
        %1471 = vmatmul.mubr.bf16.gmra.mrb[0].mxu0 %v1401
        %v1472 = vpop.f32.mrb[0].mxu0
        %v1473 = vadd.f32 %v1352, %v1472
        %v1474 = vpop.f32.mrb[0].mxu0
        %v1475 = vpop.f32.mrb[0].mxu0
        %v1476 = vadd.f32 %v1355, %v1475
        %v1477 = vpop.f32.mrb[0].mxu0
        %1478 = vmatprep.mubr.bf16.mxu0 0
        %1479 = vmatmul.mubr.bf16.gmra.mrb[0].mxu0 %v1403
        %v1480 = vpop.f32.mrb[0].mxu0
        %v1481 = vadd.f32 %v1360, %v1480
        %v1482 = vpop.f32.mrb[0].mxu0
        %v1483 = vpop.f32.mrb[0].mxu0
        %v1484 = vadd.f32 %v1363, %v1483
        %v1485 = vpop.f32.mrb[0].mxu0
        %1486 = vmatprep.mubr.bf16.mxu0 0
        %1487 = vmatmul.mubr.bf16.gmra.mrb[0].mxu0 %v1405
        %v1488 = vpop.f32.mrb[0].mxu0
        %v1489 = vadd.f32 %v1368, %v1488
        %v1490 = vpop.f32.mrb[0].mxu0
        %v1491 = vpop.f32.mrb[0].mxu0
        %v1492 = vadd.f32 %v1371, %v1491
        %v1493 = vpop.f32.mrb[0].mxu0
        %1494 = vmatprep.mubr.bf16.mxu0 0
        %1495 = vmatmul.mubr.bf16.gmra.mrb[0].mxu0 %v1407
        %v1496 = vpop.f32.mrb[0].mxu0
        %v1497 = vadd.f32 %v1376, %v1496
        %v1498 = vpop.f32.mrb[0].mxu0
        %v1499 = vpop.f32.mrb[0].mxu0
        %v1500 = vadd.f32 %v1379, %v1499
        %v1501 = vpop.f32.mrb[0].mxu0
        %1502 = vmatprep.mubr.bf16.mxu0 0
        %1503 = vmatmul.mubr.bf16.gmra.mrb[0].mxu0 %v1409
        %v1504 = vpop.f32.mrb[0].mxu0
        %v1505 = vadd.f32 %v1384, %v1504
        %v1506 = vpop.f32.mrb[0].mxu0
        %v1507 = vpop.f32.mrb[0].mxu0
        %v1508 = vadd.f32 %v1387, %v1507
        %v1509 = vpop.f32.mrb[0].mxu0
        %1510 = vdwg.mxu0
        %v1511 = vld [vmem:[%s916] sm:$0xe]
        %v1512 = vld [vmem:[%s916 + $0xc] sm:$0xe]
        %v1513 = vld [vmem:[%s916 + $0x18] sm:$0xe]
        %v1514 = vld [vmem:[%s916 + $0x24] sm:$0xe]
        %v1515 = vld [vmem:[%s916 + $0x30] sm:$0xe]
        %v1516 = vld [vmem:[%s916 + $0x3c] sm:$0xe]
        %v1517 = vld [vmem:[%s916 + $0x48] sm:$0xe]
        %v1518 = vld [vmem:[%s916 + $0x54] sm:$0xe]
        %v1519 = vld [vmem:[%s916 + $0x60] sm:$0xe]
        %v1520 = vld [vmem:[%s916 + $0x6c] sm:$0xe]
        %v1529 = vunpack.c.l.b16 %v1511
        %v1530 = vunpack.c.l.b16 %v1512
        %v1531 = vunpack.c.l.b16 %v1513
        %v1532 = vunpack.c.l.b16 %v1514
        %v1533 = vunpack.c.l.b16 %v1515
        %v1534 = vunpack.c.l.b16 %v1516
        %v1535 = vunpack.c.l.b16 %v1517
        %v1536 = vunpack.c.l.b16 %v1518
        %v1537 = vpack.c.b16 %v954, %v1529
        %v1538 = vpack.c.b16 %v956, %v1530
        %v1539 = vpack.c.b16 %v958, %v1531
        %v1540 = vpack.c.b16 %v960, %v1532
        %v1541 = vpack.c.b16 %v962, %v1533
        %v1542 = vpack.c.b16 %v964, %v1534
        %v1543 = vpack.c.b16 %v966, %v1535
        %v1544 = vpack.c.b16 %v968, %v1536
        %v1546 = vunpack.c.l.b16 %v1519
        %v1547 = vpack.c.b16 %v980, %v1546
        %1548 = vrot.lane.b32.xlu0 %v1538, 4
        %v1549 = vpop.permute.xlu0 %1548
        %1550 = vrot.lane.b32.xlu0 %v1539, 4
        %v1551 = vpop.permute.xlu0 %1550
        %1552 = vrot.lane.b32.xlu0 %v1540, 4
        %v1553 = vpop.permute.xlu0 %1552
        %1554 = vrot.lane.b32.xlu0 %v1541, 4
        %v1555 = vpop.permute.xlu0 %1554
        %1556 = vrot.lane.b32.xlu0 %v1542, 4
        %v1557 = vpop.permute.xlu0 %1556
        %1558 = vrot.lane.b32.xlu0 %v1543, 4
        %v1559 = vpop.permute.xlu0 %1558
        %1560 = vrot.lane.b32.xlu0 %v1544, 4
        %v1561 = vpop.permute.xlu0 %1560
        %1562 = vrot.lane.b32.xlu0 %v1547, 4
        %v1563 = vpop.permute.xlu0 %1562
        %v1565 = vunpack.c.l.b16 %v1520
        %v1566 = vpack.c.b16 %v1001, %v1565
        %1567 = vrot.lane.b32.xlu0 %v1539, 8
        %v1568 = vpop.permute.xlu0 %1567
        %1569 = vrot.lane.b32.xlu0 %v1540, 8
        %v1570 = vpop.permute.xlu0 %1569
        %1571 = vrot.lane.b32.xlu0 %v1541, 8
        %v1572 = vpop.permute.xlu0 %1571
        %1573 = vrot.lane.b32.xlu0 %v1542, 8
        %v1574 = vpop.permute.xlu0 %1573
        %1575 = vrot.lane.b32.xlu0 %v1543, 8
        %v1576 = vpop.permute.xlu0 %1575
        %1577 = vrot.lane.b32.xlu0 %v1544, 8
        %v1578 = vpop.permute.xlu0 %1577
        %1579 = vrot.lane.b32.xlu0 %v1547, 8
        %v1580 = vpop.permute.xlu0 %1579
        %1581 = vrot.lane.b32.xlu0 %v1566, 8
        %v1582 = vpop.permute.xlu0 %1581
        %v1585 = vsel %vm1019, %v1537, %v1549
        %v1588 = vsel %vm1019, %v1538, %v1551
        %v1591 = vsel %vm1019, %v1539, %v1553
        %v1594 = vsel %vm1019, %v1540, %v1555
        %v1597 = vsel %vm1019, %v1541, %v1557
        %v1600 = vsel %vm1019, %v1542, %v1559
        %v1603 = vsel %vm1019, %v1543, %v1561
        %v1606 = vsel %vm1019, %v1544, %v1563
        %v1608 = vsel %vm1044, %v1585, %v1568
        %v1610 = vsel %vm1044, %v1588, %v1570
        %v1612 = vsel %vm1044, %v1591, %v1572
        %v1614 = vsel %vm1044, %v1594, %v1574
        %v1616 = vsel %vm1044, %v1597, %v1576
        %v1618 = vsel %vm1044, %v1600, %v1578
        %v1620 = vsel %vm1044, %v1603, %v1580
        %v1622 = vsel %vm1044, %v1606, %v1582
        %vm1639 = vcmask 1046528
        %v1640 = vrot.slane %v1608, 1
        %v1641 = vrot.slane %v1160, 1
        %v1642 = vsel %vm1639, %v1640, %v1641
        %v1643 = vrot.slane %v1610, 1
        %v1644 = vrot.slane %v1162, 1
        %v1645 = vsel %vm1639, %v1643, %v1644
        %v1646 = vrot.slane %v1612, 1
        %v1647 = vrot.slane %v1164, 1
        %v1648 = vsel %vm1639, %v1646, %v1647
        %v1649 = vrot.slane %v1614, 1
        %v1650 = vrot.slane %v1166, 1
        %v1651 = vsel %vm1639, %v1649, %v1650
        %v1652 = vrot.slane %v1616, 1
        %v1653 = vrot.slane %v1168, 1
        %v1654 = vsel %vm1639, %v1652, %v1653
        %v1655 = vrot.slane %v1618, 1
        %v1656 = vrot.slane %v1170, 1
        %v1657 = vsel %vm1639, %v1655, %v1656
        %v1658 = vrot.slane %v1620, 1
        %v1659 = vrot.slane %v1172, 1
        %v1660 = vsel %vm1639, %v1658, %v1659
        %v1661 = vrot.slane %v1622, 1
        %v1662 = vrot.slane %v1174, 1
        %v1663 = vsel %vm1639, %v1661, %v1662
        %s1664 = scalar_lea.vmem %s3, 16
        %v1665 = vld [vmem:[%s1664] sm:$0xf]
        %v1666 = vld [vmem:[%s1664 + $0x4] sm:$0x3]
        %v1669 = vunpack.c.l.b16 %v1665
        %v1670 = vunpack.c.l.b16 %v1666
        %v1671 = vpack.c.b16 %v1670, %v1669
        %v1673 = vsel %vm1264, %v1642, 0
        %v1676 = vsel %vm1264, %v1645, 0
        %v1679 = vsel %vm1264, %v1648, 0
        %v1682 = vsel %vm1264, %v1651, 0
        %v1685 = vsel %vm1264, %v1654, 0
        %v1688 = vsel %vm1264, %v1657, 0
        %v1691 = vsel %vm1264, %v1660, 0
        %v1694 = vsel %vm1264, %v1663, 0
        %v1697 = vsel %vm1289, %v1671, 0
        %1699 = vmatprep.subr.bf16.mxu0 0
        %1700 = vmatpush1.bf16.msra.mxu0 %v1697
        %1701 = vmatprep.subr.bf16.mxu0 0
        %1702 = vmatpush1.bf16.msra.mxu0 0
        %1703 = vmatprep.subr.bf16.mxu0 0
        %1704 = vmatpush1.bf16.msra.mxu0 0
        %1705 = vmatprep.subr.bf16.mxu0 0
        %1706 = vmatpush1.bf16.msra.mxu0 0
        %1707 = vmatprep.subr.bf16.mxu0 0
        %1708 = vmatpush1.bf16.msra.mxu0 0
        %1709 = vmatprep.subr.bf16.mxu0 0
        %1710 = vmatpush1.bf16.msra.mxu0 0
        %1711 = vmatprep.subr.bf16.mxu0 0
        %1712 = vmatpush1.bf16.msra.mxu0 0
        %1713 = vmatprep.subr.bf16.mxu0 0
        %1714 = vmatpush1.bf16.msra.mxu0 0
        %1715 = vmatprep.subr.bf16.mxu0 0
        %1716 = vmatpush1.bf16.msra.mxu0 0
        %1717 = vmatprep.subr.bf16.mxu0 0
        %1718 = vmatpush1.bf16.msra.mxu0 0
        %1719 = vmatprep.subr.bf16.mxu0 0
        %1720 = vmatpush1.bf16.msra.mxu0 0
        %1721 = vmatprep.subr.bf16.mxu0 0
        %1722 = vmatpush1.bf16.msra.mxu0 0
        %1723 = vmatprep.subr.bf16.mxu0 0
        %1724 = vmatpush1.bf16.msra.mxu0 0
        %1725 = vmatprep.subr.bf16.mxu0 0
        %1726 = vmatpush1.bf16.msra.mxu0 0
        %1727 = vmatprep.subr.bf16.mxu0 0
        %1728 = vmatpush1.bf16.msra.mxu0 0
        %1729 = vmatprep.subr.bf16.mxu0 0
        %1730 = vmatpush1.bf16.msra.mxu0 0
        %1731 = vmatprep.mubr.bf16.mxu0 0
        %1732 = vmatmul.mubr.bf16.gmra.mrb[0].mxu0 %v1673
        %v1733 = vpop.f32.mrb[0].mxu0
        %v1734 = vadd.f32 0.0, %v1733
        %v1735 = vpop.f32.mrb[0].mxu0
        %v1736 = vpop.f32.mrb[0].mxu0
        %v1737 = vadd.f32 0.0, %v1736
        %v1738 = vpop.f32.mrb[0].mxu0
        %1739 = vmatprep.mubr.bf16.mxu0 0
        %1740 = vmatmul.mubr.bf16.gmra.mrb[0].mxu0 %v1676
        %v1741 = vpop.f32.mrb[0].mxu0
        %v1742 = vadd.f32 0.0, %v1741
        %v1743 = vpop.f32.mrb[0].mxu0
        %v1744 = vpop.f32.mrb[0].mxu0
        %v1745 = vadd.f32 0.0, %v1744
        %v1746 = vpop.f32.mrb[0].mxu0
        %1747 = vmatprep.mubr.bf16.mxu0 0
        %1748 = vmatmul.mubr.bf16.gmra.mrb[0].mxu0 %v1679
        %v1749 = vpop.f32.mrb[0].mxu0
        %v1750 = vadd.f32 0.0, %v1749
        %v1751 = vpop.f32.mrb[0].mxu0
        %v1752 = vpop.f32.mrb[0].mxu0
        %v1753 = vadd.f32 0.0, %v1752
        %v1754 = vpop.f32.mrb[0].mxu0
        %1755 = vmatprep.mubr.bf16.mxu0 0
        %1756 = vmatmul.mubr.bf16.gmra.mrb[0].mxu0 %v1682
        %v1757 = vpop.f32.mrb[0].mxu0
        %v1758 = vadd.f32 0.0, %v1757
        %v1759 = vpop.f32.mrb[0].mxu0
        %v1760 = vpop.f32.mrb[0].mxu0
        %v1761 = vadd.f32 0.0, %v1760
        %v1762 = vpop.f32.mrb[0].mxu0
        %1763 = vmatprep.mubr.bf16.mxu0 0
        %1764 = vmatmul.mubr.bf16.gmra.mrb[0].mxu0 %v1685
        %v1765 = vpop.f32.mrb[0].mxu0
        %v1766 = vadd.f32 0.0, %v1765
        %v1767 = vpop.f32.mrb[0].mxu0
        %v1768 = vpop.f32.mrb[0].mxu0
        %v1769 = vadd.f32 0.0, %v1768
        %v1770 = vpop.f32.mrb[0].mxu0
        %1771 = vmatprep.mubr.bf16.mxu0 0
        %1772 = vmatmul.mubr.bf16.gmra.mrb[0].mxu0 %v1688
        %v1773 = vpop.f32.mrb[0].mxu0
        %v1774 = vadd.f32 0.0, %v1773
        %v1775 = vpop.f32.mrb[0].mxu0
        %v1776 = vpop.f32.mrb[0].mxu0
        %v1777 = vadd.f32 0.0, %v1776
        %v1778 = vpop.f32.mrb[0].mxu0
        %1779 = vmatprep.mubr.bf16.mxu0 0
        %1780 = vmatmul.mubr.bf16.gmra.mrb[0].mxu0 %v1691
        %v1781 = vpop.f32.mrb[0].mxu0
        %v1782 = vadd.f32 0.0, %v1781
        %v1783 = vpop.f32.mrb[0].mxu0
        %v1784 = vpop.f32.mrb[0].mxu0
        %v1785 = vadd.f32 0.0, %v1784
        %v1786 = vpop.f32.mrb[0].mxu0
        %1787 = vmatprep.mubr.bf16.mxu0 0
        %1788 = vmatmul.mubr.bf16.gmra.mrb[0].mxu0 %v1694
        %v1789 = vpop.f32.mrb[0].mxu0
        %v1790 = vadd.f32 0.0, %v1789
        %v1791 = vpop.f32.mrb[0].mxu0
        %v1792 = vpop.f32.mrb[0].mxu0
        %v1793 = vadd.f32 0.0, %v1792
        %v1794 = vpop.f32.mrb[0].mxu0
        %1795 = vdwg.mxu0
        %v1796 = vadd.f32 %v1449, %v1734
        %v1797 = vadd.f32 %v1452, %v1737
        %v1798 = vadd.f32 %v1457, %v1742
        %v1799 = vadd.f32 %v1460, %v1745
        %v1800 = vadd.f32 %v1465, %v1750
        %v1801 = vadd.f32 %v1468, %v1753
        %v1802 = vadd.f32 %v1473, %v1758
        %v1803 = vadd.f32 %v1476, %v1761
        %v1804 = vadd.f32 %v1481, %v1766
        %v1805 = vadd.f32 %v1484, %v1769
        %v1806 = vadd.f32 %v1489, %v1774
        %v1807 = vadd.f32 %v1492, %v1777
        %v1808 = vadd.f32 %v1497, %v1782
        %v1809 = vadd.f32 %v1500, %v1785
        %v1810 = vadd.f32 %v1505, %v1790
        %v1811 = vadd.f32 %v1508, %v1793
        %v1812 = vld [vmem:[%s4] sm:$0x1]
        %v1814 = vlaneseq
        %v1815 = vshrl.u32 %v1814, 7
        %v1816 = vsub.s32 0, %v1815
        %v1817 = vrot.slane %v1812, %v1816
        %v1819 = vadd.f32 %v1796, %v1817
        %v1820 = vadd.f32 %v1797, %v1817
        %v1821 = vadd.f32 %v1798, %v1817
        %v1822 = vadd.f32 %v1799, %v1817
        %v1823 = vadd.f32 %v1800, %v1817
        %v1824 = vadd.f32 %v1801, %v1817
        %v1825 = vadd.f32 %v1802, %v1817
        %v1826 = vadd.f32 %v1803, %v1817
        %v1827 = vadd.f32 %v1804, %v1817
        %v1828 = vadd.f32 %v1805, %v1817
        %v1829 = vadd.f32 %v1806, %v1817
        %v1830 = vadd.f32 %v1807, %v1817
        %v1831 = vadd.f32 %v1808, %v1817
        %v1832 = vadd.f32 %v1809, %v1817
        %v1833 = vadd.f32 %v1810, %v1817
        %v1834 = vadd.f32 %v1811, %v1817
        %vm1835 = vcmp.gt.f32.partialorder %v1819, 0.0
        %vm1836 = vcmp.gt.f32.partialorder %v1820, 0.0
        %vm1837 = vcmp.gt.f32.partialorder %v1821, 0.0
        %vm1838 = vcmp.gt.f32.partialorder %v1822, 0.0
        %vm1839 = vcmp.gt.f32.partialorder %v1823, 0.0
        %vm1840 = vcmp.gt.f32.partialorder %v1824, 0.0
        %vm1841 = vcmp.gt.f32.partialorder %v1825, 0.0
        %vm1842 = vcmp.gt.f32.partialorder %v1826, 0.0
        %vm1843 = vcmp.gt.f32.partialorder %v1827, 0.0
        %vm1844 = vcmp.gt.f32.partialorder %v1828, 0.0
        %vm1845 = vcmp.gt.f32.partialorder %v1829, 0.0
        %vm1846 = vcmp.gt.f32.partialorder %v1830, 0.0
        %vm1847 = vcmp.gt.f32.partialorder %v1831, 0.0
        %vm1848 = vcmp.gt.f32.partialorder %v1832, 0.0
        %vm1849 = vcmp.gt.f32.partialorder %v1833, 0.0
        %vm1850 = vcmp.gt.f32.partialorder %v1834, 0.0
        %v1851 = vmul.f32 %v1819, 0.1
        %v1852 = vmul.f32 %v1820, 0.1
        %v1853 = vmul.f32 %v1821, 0.1
        %v1854 = vmul.f32 %v1822, 0.1
        %v1855 = vmul.f32 %v1823, 0.1
        %v1856 = vmul.f32 %v1824, 0.1
        %v1857 = vmul.f32 %v1825, 0.1
        %v1858 = vmul.f32 %v1826, 0.1
        %v1859 = vmul.f32 %v1827, 0.1
        %v1860 = vmul.f32 %v1828, 0.1
        %v1861 = vmul.f32 %v1829, 0.1
        %v1862 = vmul.f32 %v1830, 0.1
        %v1863 = vmul.f32 %v1831, 0.1
        %v1864 = vmul.f32 %v1832, 0.1
        %v1865 = vmul.f32 %v1833, 0.1
        %v1866 = vmul.f32 %v1834, 0.1
        %v1867 = vsel %vm1835, %v1819, %v1851
        %v1868 = vsel %vm1836, %v1820, %v1852
        %v1869 = vsel %vm1837, %v1821, %v1853
        %v1870 = vsel %vm1838, %v1822, %v1854
        %v1871 = vsel %vm1839, %v1823, %v1855
        %v1872 = vsel %vm1840, %v1824, %v1856
        %v1873 = vsel %vm1841, %v1825, %v1857
        %v1874 = vsel %vm1842, %v1826, %v1858
        %v1875 = vsel %vm1843, %v1827, %v1859
        %v1876 = vsel %vm1844, %v1828, %v1860
        %v1877 = vsel %vm1845, %v1829, %v1861
        %v1878 = vsel %vm1846, %v1830, %v1862
        %v1879 = vsel %vm1847, %v1831, %v1863
        %v1880 = vsel %vm1848, %v1832, %v1864
        %v1881 = vsel %vm1849, %v1833, %v1865
        %v1882 = vsel %vm1850, %v1834, %v1866
        %v1883 = vld [vmem:[#allocation3] sm:$0xff]
        %v1884 = vld [vmem:[#allocation3 + $0x8] sm:$0xff]
        %v1885 = vld [vmem:[#allocation3 + $0x10] sm:$0xff]
        %v1886 = vld [vmem:[#allocation3 + $0x18] sm:$0xff]
        %v1887 = vld [vmem:[#allocation3 + $0x20] sm:$0xff]
        %v1888 = vld [vmem:[#allocation3 + $0x28] sm:$0xff]
        %v1889 = vld [vmem:[#allocation3 + $0x30] sm:$0xff]
        %v1890 = vld [vmem:[#allocation3 + $0x38] sm:$0xff]
        %v1891 = vld [vmem:[#allocation3 + $0x40] sm:$0xff]
        %v1892 = vld [vmem:[#allocation3 + $0x48] sm:$0xff]
        %v1893 = vld [vmem:[#allocation3 + $0x50] sm:$0xff]
        %v1894 = vld [vmem:[#allocation3 + $0x58] sm:$0xff]
        %v1895 = vld [vmem:[#allocation3 + $0x60] sm:$0xff]
        %v1896 = vld [vmem:[#allocation3 + $0x68] sm:$0xff]
        %v1897 = vld [vmem:[#allocation3 + $0x70] sm:$0xff]
        %v1898 = vld [vmem:[#allocation3 + $0x78] sm:$0xff]
        %v1899 = vadd.f32 %v1883, %v1867
        %v1900 = vadd.f32 %v1884, %v1868
        %v1901 = vadd.f32 %v1885, %v1869
        %v1902 = vadd.f32 %v1886, %v1870
        %v1903 = vadd.f32 %v1887, %v1871
        %v1904 = vadd.f32 %v1888, %v1872
        %v1905 = vadd.f32 %v1889, %v1873
        %v1906 = vadd.f32 %v1890, %v1874
        %v1907 = vadd.f32 %v1891, %v1875
        %v1908 = vadd.f32 %v1892, %v1876
        %v1909 = vadd.f32 %v1893, %v1877
        %v1910 = vadd.f32 %v1894, %v1878
        %v1911 = vadd.f32 %v1895, %v1879
        %v1912 = vadd.f32 %v1896, %v1880
        %v1913 = vadd.f32 %v1897, %v1881
        %v1914 = vadd.f32 %v1898, %v1882
        %1915 = vst.msk [vmem:[%s288] sm:$0xff] %vm1044, %v1899
        %1916 = vst.msk [vmem:[%s288 + $0x8] sm:$0xff] %vm1044, %v1900
        %1917 = vst.msk [vmem:[%s288 + $0x10] sm:$0xff] %vm1044, %v1901
        %1918 = vst.msk [vmem:[%s288 + $0x18] sm:$0xff] %vm1044, %v1902
        %1919 = vst.msk [vmem:[%s288 + $0x20] sm:$0xff] %vm1044, %v1903
        %1920 = vst.msk [vmem:[%s288 + $0x28] sm:$0xff] %vm1044, %v1904
        %1921 = vst.msk [vmem:[%s288 + $0x30] sm:$0xff] %vm1044, %v1905
        %1922 = vst.msk [vmem:[%s288 + $0x38] sm:$0xff] %vm1044, %v1906
        %1923 = vst.msk [vmem:[%s288 + $0x40] sm:$0xff] %vm1044, %v1907
        %1924 = vst.msk [vmem:[%s288 + $0x48] sm:$0xff] %vm1044, %v1908
        %1925 = vst.msk [vmem:[%s288 + $0x50] sm:$0xff] %vm1044, %v1909
        %1926 = vst.msk [vmem:[%s288 + $0x58] sm:$0xff] %vm1044, %v1910
        %1927 = vst.msk [vmem:[%s288 + $0x60] sm:$0xff] %vm1044, %v1911
        %1928 = vst.msk [vmem:[%s288 + $0x68] sm:$0xff] %vm1044, %v1912
        %1929 = vst.msk [vmem:[%s288 + $0x70] sm:$0xff] %vm1044, %v1913
        %1930 = vst.msk [vmem:[%s288 + $0x78] sm:$0xff] %vm1044, %v1914
      $region52: #{tpu_custom_call.1} parent=39 // pred_fallthru
        _
      // Predicated region
      $region53: #{tpu_custom_call.1} parent=39 // pred_check
        %p1931 = pneg %p420
      $region54: #{tpu_custom_call.1} parent=39 // pred_check_branch
        %1933 = sbr.rel (%p1931) target = $region56
      $region55: #{tpu_custom_call.1} parent=39 // pred_region
        %v1934 = vld [vmem:[%s273] sm:$0xff]
        %v1935 = vld [vmem:[%s273 + $0x8] sm:$0xff]
        %v1936 = vld [vmem:[%s273 + $0x10] sm:$0xff]
        %v1937 = vld [vmem:[%s273 + $0x18] sm:$0xff]
        %v1938 = vld [vmem:[%s273 + $0x20] sm:$0xff]
        %v1939 = vld [vmem:[%s273 + $0x28] sm:$0xff]
        %v1940 = vld [vmem:[%s273 + $0x30] sm:$0xff]
        %v1941 = vld [vmem:[%s273 + $0x38] sm:$0xff]
        %v1942 = vld [vmem:[%s273 + $0x40] sm:$0xff]
        %v1943 = vld [vmem:[%s273 + $0x48] sm:$0xff]
        %v1944 = vld [vmem:[%s273 + $0x50] sm:$0xff]
        %v1945 = vld [vmem:[%s273 + $0x58] sm:$0xff]
        %v1946 = vld [vmem:[%s273 + $0x60] sm:$0xff]
        %v1947 = vld [vmem:[%s273 + $0x68] sm:$0xff]
        %v1948 = vld [vmem:[%s273 + $0x70] sm:$0xff]
        %v1949 = vld [vmem:[%s273 + $0x78] sm:$0xff]
        %vm1950 = vcmask 64512
        %1951 = vst.msk [vmem:[#allocation3] sm:$0xff] %vm1950, %v1934
        %1952 = vst.msk [vmem:[#allocation3 + $0x8] sm:$0xff] %vm1950, %v1935
        %1953 = vst.msk [vmem:[#allocation3 + $0x10] sm:$0xff] %vm1950, %v1936
        %1954 = vst.msk [vmem:[#allocation3 + $0x18] sm:$0xff] %vm1950, %v1937
        %1955 = vst.msk [vmem:[#allocation3 + $0x20] sm:$0xff] %vm1950, %v1938
        %1956 = vst.msk [vmem:[#allocation3 + $0x28] sm:$0xff] %vm1950, %v1939
        %1957 = vst.msk [vmem:[#allocation3 + $0x30] sm:$0xff] %vm1950, %v1940
        %1958 = vst.msk [vmem:[#allocation3 + $0x38] sm:$0xff] %vm1950, %v1941
        %1959 = vst.msk [vmem:[#allocation3 + $0x40] sm:$0xff] %vm1950, %v1942
        %1960 = vst.msk [vmem:[#allocation3 + $0x48] sm:$0xff] %vm1950, %v1943
        %1961 = vst.msk [vmem:[#allocation3 + $0x50] sm:$0xff] %vm1950, %v1944
        %1962 = vst.msk [vmem:[#allocation3 + $0x58] sm:$0xff] %vm1950, %v1945
        %1963 = vst.msk [vmem:[#allocation3 + $0x60] sm:$0xff] %vm1950, %v1946
        %1964 = vst.msk [vmem:[#allocation3 + $0x68] sm:$0xff] %vm1950, %v1947
        %1965 = vst.msk [vmem:[#allocation3 + $0x70] sm:$0xff] %vm1950, %v1948
        %1966 = vst.msk [vmem:[#allocation3 + $0x78] sm:$0xff] %vm1950, %v1949
      $region56: #{tpu_custom_call.1} parent=39 // pred_fallthru
        _
      %s1967 = ssub.s32 %s21, 1
      %p1968 = scmp.gt.s32.totalorder %s1967, 0
      %s1969 = scalar_select %p1968, %s1967, 0
      %s1970 = smul.u32 16, %s1969
      %p1971 = scmp.lt.s32.totalorder %s20, 1
      %s1972 = scalar_select %p1971, %s20, 1
      %p1973 = scmp.lt.s32.totalorder %s1970, 31
      %s1974 = scalar_select %p1973, %s1970, 31
      %s1975 = smul.addr %s1972, 32
      %s1976 = sadd.s32 %s1974, %s1975
      %s1977 = smul.addr %s1976, 8
      %s1978 = scalar_lea.vmem %s5, %s1977
      // Predicated region
      $region57: #{tpu_custom_call.1} parent=39 // pred_check
        %p1979 = pneg %p170
      $region58: #{tpu_custom_call.1} parent=39 // pred_check_branch
        %1981 = sbr.rel (%p1979) target = $region60
      $region59: #{tpu_custom_call.1} parent=39 // pred_region
        %s1982 = ssub.s32 %s21, 1
        %p1983 = scmp.gt.s32.totalorder %s1982, 0
        %s1984 = scalar_select %p1983, %s1982, 0
        %s1985 = smul.u32 16, %s1984
      $region60: #{tpu_custom_call.1} parent=39 // pred_fallthru
        _
    $region40: #{tpu_custom_call.1} parent=5 // pred_fallthru
      _
    %p1986 = scmp.le.s32.totalorder 2, %s11
    // Predicated region
    $region61: #{tpu_custom_call.1} parent=5 // pred_check
      %p1987 = pneg %p1986
    $region62: #{tpu_custom_call.1} parent=5 // pred_check_branch
      %1989 = sbr.rel (%p1987) target = $region64
    $region63: #{tpu_custom_call.1} parent=5 // pred_region
      %s1990 = ssub.s32 %s11, 2
      // Predicated region
      $region65: #{tpu_custom_call.1} parent=63 // pred_check
        %p1991 = pneg %p176
      $region66: #{tpu_custom_call.1} parent=63 // pred_check_branch
        %1993 = sbr.rel (%p1991) target = $region68
      $region67: #{tpu_custom_call.1} parent=63 // pred_region
        %s1994 = ssub.s32 %s23, 1
        %p1995 = scmp.gt.s32.totalorder %s1994, 0
        %s1996 = scalar_select %p1995, %s1994, 0
        %s1997 = smul.u32 16, %s1996
        %p1998 = scmp.lt.s32.totalorder %s22, 1
        %s1999 = scalar_select %p1998, %s22, 1
        %p2000 = scmp.lt.s32.totalorder %s1997, 31
        %s2001 = scalar_select %p2000, %s1997, 31
        %s2002 = smul.addr %s1999, 32
        %s2003 = sadd.s32 %s2001, %s2002
        %s2004 = smul.addr %s2003, 8
        %s2005 = scalar_lea.vmem %s5, %s2004
      $region68: #{tpu_custom_call.1} parent=63 // pred_fallthru
        _
    $region64: #{tpu_custom_call.1} parent=5 // pred_fallthru
      _
  $region6: #{tpu_custom_call.1} parent=0 // loop_footer
    %s15 = sadd.s32 1, %s11
  $region7: #{tpu_custom_call.1} parent=0 // loop_footer_branch
    %10 = sbr.rel target = $region3
  $region8: #{tpu_custom_call.1} parent=0 // loop_exit
    _

</llo_original>
